<compile_context>
chip_gen: v6e
topology: v6e:2x2x1
jax: 0.10.0
libtpu: 0.0.40
codegen_flags: <defaults>
</compile_context>

<pallas_src>
import functools

import jax
import jax.numpy as jnp
import numpy as np
from jax.experimental import pallas as pl
from jax.experimental.pallas import tpu as pltpu


def make_gauss_weights_1d(sigma: float, radius: int):
    """1-D Gaussian weights (normalised); outer(w, w) equals the module's 2D kernel."""
    coords = np.arange(-radius, radius + 1, dtype=np.float32)
    g = np.exp(-(coords * coords) / (2.0 * np.float32(sigma) ** 2)).astype(np.float32)
    g = g / g.sum()
    return tuple(float(v) for v in g)


def make_gauss_kernel_2d(sigma: float, radius: int) -> jnp.ndarray:
    """2-D Gaussian kernel, identical math to the PyTorch __init__ (for reference)."""
    coords = jnp.asarray(np.arange(-radius, radius + 1), dtype=jnp.float32)
    x = coords[None, :]
    y = coords[:, None]
    k = jnp.exp(-(x * x + y * y) / (2.0 * (sigma ** 2)))
    return k / jnp.sum(k)


def _gauss_blur_kernel(x_ref, o_ref, xp_ref, tp_ref, *, w1d, radius, strip_h):
    """Separable 9x9 Gaussian blur on a (H, W, TILE_NC) channels-last block.

    x_ref  : VMEM (H, W, T)          input block (T = channel-lane tile)
    o_ref  : VMEM (H, W, T) f32      blurred output block
    xp_ref : VMEM (H+2r, W, T) f32   row-padded scratch (zero halo rows)
    tp_ref : VMEM (strip_h, W+2r, T) f32  column-padded scratch for one row strip
    """
    H, W, T = o_ref.shape
    r = radius
    K = 2 * r + 1

    # Zero the halos every grid step (cheap; also stays correct if the parallel
    # grid axis is split across TensorCores, unlike a program_id==0 one-shot).
    zrow = jnp.zeros((r, W, T), jnp.float32)
    xp_ref[0:r] = zrow
    xp_ref[r + H:r + H + r] = zrow
    zcol = jnp.zeros((strip_h, r, T), jnp.float32)
    tp_ref[:, 0:r] = zcol
    tp_ref[:, r + W:r + W + r] = zcol

    # Interior rows of the row-padded image (cast once to f32).
    xp_ref[r:r + H] = x_ref[...].astype(jnp.float32)

    # Process the output in row strips to bound accumulator vreg pressure.
    row = 0
    while row < H:
        sh = min(strip_h, H - row)

        # --- vertical 1-D pass: taps move along H (pure vreg addressing) ---
        v = w1d[0] * xp_ref[row:row + sh]
        for i in range(1, K):
            v = v + w1d[i] * xp_ref[row + i:row + i + sh]
        tp_ref[0:sh, r:r + W] = v

        # --- horizontal 1-D pass: taps move along W (sublane shifts only) ---
        acc = w1d[0] * tp_ref[0:sh, 0:W]
        for j in range(1, K):
            acc = acc + w1d[j] * tp_ref[0:sh, j:j + W]
        o_ref[row:row + sh] = acc

        row += strip_h


def _choose_nc_tiling(nc, h, w, radius, vmem_budget_bytes=16 * 1024 * 1024):
    """Pick (tile_nc, padded_nc).

    The last block dim is either the full channel axis or a multiple of 128
    (TPU lane-layout rule), and the double-buffered in/out blocks plus the two
    scratch buffers stay well inside scoped VMEM on every generation
    (including v7x's smaller VMEM)."""
    hp, wp = h + 2 * radius, w + 2 * radius
    strip_h = min(h, 8)
    # f32 bytes per channel-lane resident in VMEM:
    #   double-buffered (in + out) blocks + the two scratch buffers.
    per_lane = 4 * (2 * 2 * h * w + hp * w + strip_h * wp)
    budget_lanes = max(1, vmem_budget_bytes // per_lane)
    if nc <= 256 and nc <= budget_lanes:
        return nc, nc                         # a single block covers all channels
    tile = min(budget_lanes, 512, nc)
    tile = max(128, (tile // 128) * 128)      # lane-dense multiples of 128
    padded = ((nc + tile - 1) // tile) * tile
    return tile, padded


def gauss_blur(data: jnp.ndarray, sigma: float = 1.5, filter_size: int = 4) -> jnp.ndarray:
    """Equivalent of GaussBlur(sigma, filter_size).forward(data); data is NCHW.

    Returns float32 (matching F.conv2d with the module's float32 weights)."""
    radius = int(filter_size)
    ksize = 2 * radius + 1
    assert ksize == 9, "forward() expands the weight to 9x9 -> filter_size must be 4"

    N, C, H, W = data.shape
    NC = N * C
    w1d = make_gauss_weights_1d(sigma, radius)

    # Channels-last layout (layout plumbing): lane axis = flattened batch*channel.
    x = jnp.transpose(data.reshape(NC, H, W), (1, 2, 0))            # (H, W, NC)

    tile_nc, nc_pad = _choose_nc_tiling(NC, H, W, radius)
    if nc_pad != NC:
        x = jnp.pad(x, ((0, 0), (0, 0), (0, nc_pad - NC)))
    grid = nc_pad // tile_nc
    strip_h = min(H, 8)

    out = pl.pallas_call(
        functools.partial(_gauss_blur_kernel, w1d=w1d, radius=radius,
                          strip_h=strip_h),
        out_shape=jax.ShapeDtypeStruct((H, W, nc_pad), jnp.float32),
        grid_spec=pltpu.PrefetchScalarGridSpec(
            num_scalar_prefetch=0,
            grid=(grid,),
            in_specs=[pl.BlockSpec((H, W, tile_nc), lambda g: (0, 0, g))],
            out_specs=pl.BlockSpec((H, W, tile_nc), lambda g: (0, 0, g)),
            scratch_shapes=[
                pltpu.VMEM((H + 2 * radius, W, tile_nc), jnp.float32),
                pltpu.VMEM((strip_h, W + 2 * radius, tile_nc), jnp.float32),
            ],
        ),
        compiler_params=pltpu.CompilerParams(
            dimension_semantics=("parallel",),
        ),
    )(x)

    out = out[:, :, :NC]                                            # drop channel pad
    return jnp.transpose(out, (2, 0, 1)).reshape(N, C, H, W)


def _reference_blur(data, sigma=1.5, filter_size=4):
    """Pure-JAX reference (depthwise conv2d, padding=radius), NCHW."""
    radius = filter_size
    C = data.shape[1]
    k = make_gauss_kernel_2d(sigma, radius)
    w = jnp.broadcast_to(k[None, None], (C, 1, 2 * radius + 1, 2 * radius + 1))
    return jax.lax.conv_general_dilated(
        data.astype(jnp.float32), w,
        window_strides=(1, 1),
        padding=[(radius, radius), (radius, radius)],
        dimension_numbers=("NCHW", "OIHW", "NCHW"),
        feature_group_count=C,
    )


if __name__ == "__main__":
    key = jax.random.PRNGKey(0)
    N, C, H, W = 2, 4, 16, 16
    x = jax.random.normal(key, (N, C, H, W), dtype=jnp.float32)

    out = gauss_blur(x, sigma=1.5, filter_size=4)
    out = jax.block_until_ready(out)

    ref = jax.block_until_ready(_reference_blur(x, sigma=1.5, filter_size=4))
    np.testing.assert_allclose(np.asarray(out), np.asarray(ref), rtol=1e-5, atol=1e-5)

    print("KERNEL_OK")
</pallas_src>

<mosaic_0001>
module attributes {stable_mosaic.version = 11 : i64} {
  func.func @_gauss_blur_kernel(%arg0: i32, %arg1: memref<16x16x8xf32, #tpu.memory_space<vmem>>, %arg2: memref<16x16x8xf32, #tpu.memory_space<vmem>>, %arg3: memref<24x16x8xf32, #tpu.memory_space<vmem>>, %arg4: memref<8x24x8xf32, #tpu.memory_space<vmem>>) attributes {dimension_semantics = [#tpu.dimension_semantics<parallel>], iteration_bounds = array<i64: 1>, scalar_prefetch = 0 : i64, scratch_operands = 2 : i64, tpu.core_type = #tpu.core_type<tc>, window_params = [{transform_indices = @transform_0, window_bounds = array<i64: 16, 16, 8>}, {transform_indices = @transform_1, window_bounds = array<i64: 16, 16, 8>}]} {
    %cst = arith.constant 0.000000e+00 : f32
    %0 = vector.broadcast %cst : f32 to vector<4x16x8xf32>
    %c0 = arith.constant 0 : index
    %c0_0 = arith.constant 0 : index
    %c0_1 = arith.constant 0 : index
    %1 = vector.load %arg3[%c0, %c0_0, %c0_1] : memref<24x16x8xf32, #tpu.memory_space<vmem>>, vector<4x16x8xf32>
    tpu.vector_store %arg3[%c0, %c0_0, %c0_1], %0 {strides = array<i32>} : memref<24x16x8xf32, #tpu.memory_space<vmem>>, vector<4x16x8xf32>,
    %c20 = arith.constant 20 : index
    %c0_2 = arith.constant 0 : index
    %c0_3 = arith.constant 0 : index
    %2 = vector.load %arg3[%c20, %c0_2, %c0_3] : memref<24x16x8xf32, #tpu.memory_space<vmem>>, vector<4x16x8xf32>
    tpu.vector_store %arg3[%c20, %c0_2, %c0_3], %0 {strides = array<i32>} : memref<24x16x8xf32, #tpu.memory_space<vmem>>, vector<4x16x8xf32>,
    %cst_4 = arith.constant 0.000000e+00 : f32
    %3 = vector.broadcast %cst_4 : f32 to vector<8x4x8xf32>
    %c0_5 = arith.constant 0 : index
    %c0_6 = arith.constant 0 : index
    %c0_7 = arith.constant 0 : index
    %4 = vector.load %arg4[%c0_5, %c0_6, %c0_7] : memref<8x24x8xf32, #tpu.memory_space<vmem>>, vector<8x4x8xf32>
    tpu.vector_store %arg4[%c0_5, %c0_6, %c0_7], %3 {strides = array<i32>} : memref<8x24x8xf32, #tpu.memory_space<vmem>>, vector<8x4x8xf32>,
    %c0_8 = arith.constant 0 : index
    %c20_9 = arith.constant 20 : index
    %c0_10 = arith.constant 0 : index
    %5 = vector.load %arg4[%c0_8, %c20_9, %c0_10] : memref<8x24x8xf32, #tpu.memory_space<vmem>>, vector<8x4x8xf32>
    tpu.vector_store %arg4[%c0_8, %c20_9, %c0_10], %3 {strides = array<i32>} : memref<8x24x8xf32, #tpu.memory_space<vmem>>, vector<8x4x8xf32>,
    %c0_11 = arith.constant 0 : index
    %c0_12 = arith.constant 0 : index
    %c0_13 = arith.constant 0 : index
    %6 = vector.load %arg1[%c0_11, %c0_12, %c0_13] : memref<16x16x8xf32, #tpu.memory_space<vmem>>, vector<16x16x8xf32>
    %c4 = arith.constant 4 : index
    %c0_14 = arith.constant 0 : index
    %c0_15 = arith.constant 0 : index
    %7 = vector.load %arg3[%c4, %c0_14, %c0_15] : memref<24x16x8xf32, #tpu.memory_space<vmem>>, vector<16x16x8xf32>
    tpu.vector_store %arg3[%c4, %c0_14, %c0_15], %6 {strides = array<i32>} : memref<24x16x8xf32, #tpu.memory_space<vmem>>, vector<16x16x8xf32>,
    %c0_16 = arith.constant 0 : index
    %c0_17 = arith.constant 0 : index
    %c0_18 = arith.constant 0 : index
    %8 = vector.load %arg3[%c0_16, %c0_17, %c0_18] : memref<24x16x8xf32, #tpu.memory_space<vmem>>, vector<8x16x8xf32>
    %cst_19 = arith.constant 7.614420e-03 : f32
    %9 = vector.broadcast %cst_19 : f32 to vector<8x16x8xf32>
    %10 = arith.mulf %9, %8 : vector<8x16x8xf32>
    %c1 = arith.constant 1 : index
    %c0_20 = arith.constant 0 : index
    %c0_21 = arith.constant 0 : index
    %11 = vector.load %arg3[%c1, %c0_20, %c0_21] : memref<24x16x8xf32, #tpu.memory_space<vmem>>, vector<8x16x8xf32>
    %cst_22 = arith.constant 0.0360749736 : f32
    %12 = vector.broadcast %cst_22 : f32 to vector<8x16x8xf32>
    %13 = arith.mulf %12, %11 : vector<8x16x8xf32>
    %14 = arith.addf %10, %13 : vector<8x16x8xf32>
    %c2 = arith.constant 2 : index
    %c0_23 = arith.constant 0 : index
    %c0_24 = arith.constant 0 : index
    %15 = vector.load %arg3[%c2, %c0_23, %c0_24] : memref<24x16x8xf32, #tpu.memory_space<vmem>>, vector<8x16x8xf32>
    %cst_25 = arith.constant 0.109586097 : f32
    %16 = vector.broadcast %cst_25 : f32 to vector<8x16x8xf32>
    %17 = arith.mulf %16, %15 : vector<8x16x8xf32>
    %18 = arith.addf %14, %17 : vector<8x16x8xf32>
    %c3 = arith.constant 3 : index
    %c0_26 = arith.constant 0 : index
    %c0_27 = arith.constant 0 : index
    %19 = vector.load %arg3[%c3, %c0_26, %c0_27] : memref<24x16x8xf32, #tpu.memory_space<vmem>>, vector<8x16x8xf32>
    %cst_28 = arith.constant 0.213444561 : f32
    %20 = vector.broadcast %cst_28 : f32 to vector<8x16x8xf32>
    %21 = arith.mulf %20, %19 : vector<8x16x8xf32>
    %22 = arith.addf %18, %21 : vector<8x16x8xf32>
    %c4_29 = arith.constant 4 : index
    %c0_30 = arith.constant 0 : index
    %c0_31 = arith.constant 0 : index
    %23 = vector.load %arg3[%c4_29, %c0_30, %c0_31] : memref<24x16x8xf32, #tpu.memory_space<vmem>>, vector<8x16x8xf32>
    %cst_32 = arith.constant 2.665600e-01 : f32
    %24 = vector.broadcast %cst_32 : f32 to vector<8x16x8xf32>
    %25 = arith.mulf %24, %23 : vector<8x16x8xf32>
    %26 = arith.addf %22, %25 : vector<8x16x8xf32>
    %c5 = arith.constant 5 : index
    %c0_33 = arith.constant 0 : index
    %c0_34 = arith.constant 0 : index
    %27 = vector.load %arg3[%c5, %c0_33, %c0_34] : memref<24x16x8xf32, #tpu.memory_space<vmem>>, vector<8x16x8xf32>
    %cst_35 = arith.constant 0.213444561 : f32
    %28 = vector.broadcast %cst_35 : f32 to vector<8x16x8xf32>
    %29 = arith.mulf %28, %27 : vector<8x16x8xf32>
    %30 = arith.addf %26, %29 : vector<8x16x8xf32>
    %c6 = arith.constant 6 : index
    %c0_36 = arith.constant 0 : index
    %c0_37 = arith.constant 0 : index
    %31 = vector.load %arg3[%c6, %c0_36, %c0_37] : memref<24x16x8xf32, #tpu.memory_space<vmem>>, vector<8x16x8xf32>
    %cst_38 = arith.constant 0.109586097 : f32
    %32 = vector.broadcast %cst_38 : f32 to vector<8x16x8xf32>
    %33 = arith.mulf %32, %31 : vector<8x16x8xf32>
    %34 = arith.addf %30, %33 : vector<8x16x8xf32>
    %c7 = arith.constant 7 : index
    %c0_39 = arith.constant 0 : index
    %c0_40 = arith.constant 0 : index
    %35 = vector.load %arg3[%c7, %c0_39, %c0_40] : memref<24x16x8xf32, #tpu.memory_space<vmem>>, vector<8x16x8xf32>
    %cst_41 = arith.constant 0.0360749736 : f32
    %36 = vector.broadcast %cst_41 : f32 to vector<8x16x8xf32>
    %37 = arith.mulf %36, %35 : vector<8x16x8xf32>
    %38 = arith.addf %34, %37 : vector<8x16x8xf32>
    %c8 = arith.constant 8 : index
    %c0_42 = arith.constant 0 : index
    %c0_43 = arith.constant 0 : index
    %39 = vector.load %arg3[%c8, %c0_42, %c0_43] : memref<24x16x8xf32, #tpu.memory_space<vmem>>, vector<8x16x8xf32>
    %cst_44 = arith.constant 7.614420e-03 : f32
    %40 = vector.broadcast %cst_44 : f32 to vector<8x16x8xf32>
    %41 = arith.mulf %40, %39 : vector<8x16x8xf32>
    %42 = arith.addf %38, %41 : vector<8x16x8xf32>
    %c0_45 = arith.constant 0 : index
    %c4_46 = arith.constant 4 : index
    %c0_47 = arith.constant 0 : index
    %43 = vector.load %arg4[%c0_45, %c4_46, %c0_47] : memref<8x24x8xf32, #tpu.memory_space<vmem>>, vector<8x16x8xf32>
    tpu.vector_store %arg4[%c0_45, %c4_46, %c0_47], %42 {strides = array<i32>} : memref<8x24x8xf32, #tpu.memory_space<vmem>>, vector<8x16x8xf32>,
    %c0_48 = arith.constant 0 : index
    %c0_49 = arith.constant 0 : index
    %c0_50 = arith.constant 0 : index
    %44 = vector.load %arg4[%c0_48, %c0_49, %c0_50] : memref<8x24x8xf32, #tpu.memory_space<vmem>>, vector<8x16x8xf32>
    %cst_51 = arith.constant 7.614420e-03 : f32
    %45 = vector.broadcast %cst_51 : f32 to vector<8x16x8xf32>
    %46 = arith.mulf %45, %44 : vector<8x16x8xf32>
    %c0_52 = arith.constant 0 : index
    %c1_53 = arith.constant 1 : index
    %c0_54 = arith.constant 0 : index
    %47 = vector.load %arg4[%c0_52, %c1_53, %c0_54] : memref<8x24x8xf32, #tpu.memory_space<vmem>>, vector<8x16x8xf32>
    %cst_55 = arith.constant 0.0360749736 : f32
    %48 = vector.broadcast %cst_55 : f32 to vector<8x16x8xf32>
    %49 = arith.mulf %48, %47 : vector<8x16x8xf32>
    %50 = arith.addf %46, %49 : vector<8x16x8xf32>
    %c0_56 = arith.constant 0 : index
    %c2_57 = arith.constant 2 : index
    %c0_58 = arith.constant 0 : index
    %51 = vector.load %arg4[%c0_56, %c2_57, %c0_58] : memref<8x24x8xf32, #tpu.memory_space<vmem>>, vector<8x16x8xf32>
    %cst_59 = arith.constant 0.109586097 : f32
    %52 = vector.broadcast %cst_59 : f32 to vector<8x16x8xf32>
    %53 = arith.mulf %52, %51 : vector<8x16x8xf32>
    %54 = arith.addf %50, %53 : vector<8x16x8xf32>
    %c0_60 = arith.constant 0 : index
    %c3_61 = arith.constant 3 : index
    %c0_62 = arith.constant 0 : index
    %55 = vector.load %arg4[%c0_60, %c3_61, %c0_62] : memref<8x24x8xf32, #tpu.memory_space<vmem>>, vector<8x16x8xf32>
    %cst_63 = arith.constant 0.213444561 : f32
    %56 = vector.broadcast %cst_63 : f32 to vector<8x16x8xf32>
    %57 = arith.mulf %56, %55 : vector<8x16x8xf32>
    %58 = arith.addf %54, %57 : vector<8x16x8xf32>
    %c0_64 = arith.constant 0 : index
    %c4_65 = arith.constant 4 : index
    %c0_66 = arith.constant 0 : index
    %59 = vector.load %arg4[%c0_64, %c4_65, %c0_66] : memref<8x24x8xf32, #tpu.memory_space<vmem>>, vector<8x16x8xf32>
    %cst_67 = arith.constant 2.665600e-01 : f32
    %60 = vector.broadcast %cst_67 : f32 to vector<8x16x8xf32>
    %61 = arith.mulf %60, %59 : vector<8x16x8xf32>
    %62 = arith.addf %58, %61 : vector<8x16x8xf32>
    %c0_68 = arith.constant 0 : index
    %c5_69 = arith.constant 5 : index
    %c0_70 = arith.constant 0 : index
    %63 = vector.load %arg4[%c0_68, %c5_69, %c0_70] : memref<8x24x8xf32, #tpu.memory_space<vmem>>, vector<8x16x8xf32>
    %cst_71 = arith.constant 0.213444561 : f32
    %64 = vector.broadcast %cst_71 : f32 to vector<8x16x8xf32>
    %65 = arith.mulf %64, %63 : vector<8x16x8xf32>
    %66 = arith.addf %62, %65 : vector<8x16x8xf32>
    %c0_72 = arith.constant 0 : index
    %c6_73 = arith.constant 6 : index
    %c0_74 = arith.constant 0 : index
    %67 = vector.load %arg4[%c0_72, %c6_73, %c0_74] : memref<8x24x8xf32, #tpu.memory_space<vmem>>, vector<8x16x8xf32>
    %cst_75 = arith.constant 0.109586097 : f32
    %68 = vector.broadcast %cst_75 : f32 to vector<8x16x8xf32>
    %69 = arith.mulf %68, %67 : vector<8x16x8xf32>
    %70 = arith.addf %66, %69 : vector<8x16x8xf32>
    %c0_76 = arith.constant 0 : index
    %c7_77 = arith.constant 7 : index
    %c0_78 = arith.constant 0 : index
    %71 = vector.load %arg4[%c0_76, %c7_77, %c0_78] : memref<8x24x8xf32, #tpu.memory_space<vmem>>, vector<8x16x8xf32>
    %cst_79 = arith.constant 0.0360749736 : f32
    %72 = vector.broadcast %cst_79 : f32 to vector<8x16x8xf32>
    %73 = arith.mulf %72, %71 : vector<8x16x8xf32>
    %74 = arith.addf %70, %73 : vector<8x16x8xf32>
    %c0_80 = arith.constant 0 : index
    %c8_81 = arith.constant 8 : index
    %c0_82 = arith.constant 0 : index
    %75 = vector.load %arg4[%c0_80, %c8_81, %c0_82] : memref<8x24x8xf32, #tpu.memory_space<vmem>>, vector<8x16x8xf32>
    %cst_83 = arith.constant 7.614420e-03 : f32
    %76 = vector.broadcast %cst_83 : f32 to vector<8x16x8xf32>
    %77 = arith.mulf %76, %75 : vector<8x16x8xf32>
    %78 = arith.addf %74, %77 : vector<8x16x8xf32>
    %c0_84 = arith.constant 0 : index
    %c0_85 = arith.constant 0 : index
    %c0_86 = arith.constant 0 : index
    %79 = vector.load %arg2[%c0_84, %c0_85, %c0_86] : memref<16x16x8xf32, #tpu.memory_space<vmem>>, vector<8x16x8xf32>
    tpu.vector_store %arg2[%c0_84, %c0_85, %c0_86], %78 {strides = array<i32>} : memref<16x16x8xf32, #tpu.memory_space<vmem>>, vector<8x16x8xf32>,
    %c8_87 = arith.constant 8 : index
    %c0_88 = arith.constant 0 : index
    %c0_89 = arith.constant 0 : index
    %80 = vector.load %arg3[%c8_87, %c0_88, %c0_89] : memref<24x16x8xf32, #tpu.memory_space<vmem>>, vector<8x16x8xf32>
    %cst_90 = arith.constant 7.614420e-03 : f32
    %81 = vector.broadcast %cst_90 : f32 to vector<8x16x8xf32>
    %82 = arith.mulf %81, %80 : vector<8x16x8xf32>
    %c9 = arith.constant 9 : index
    %c0_91 = arith.constant 0 : index
    %c0_92 = arith.constant 0 : index
    %83 = vector.load %arg3[%c9, %c0_91, %c0_92] : memref<24x16x8xf32, #tpu.memory_space<vmem>>, vector<8x16x8xf32>
    %cst_93 = arith.constant 0.0360749736 : f32
    %84 = vector.broadcast %cst_93 : f32 to vector<8x16x8xf32>
    %85 = arith.mulf %84, %83 : vector<8x16x8xf32>
    %86 = arith.addf %82, %85 : vector<8x16x8xf32>
    %c10 = arith.constant 10 : index
    %c0_94 = arith.constant 0 : index
    %c0_95 = arith.constant 0 : index
    %87 = vector.load %arg3[%c10, %c0_94, %c0_95] : memref<24x16x8xf32, #tpu.memory_space<vmem>>, vector<8x16x8xf32>
    %cst_96 = arith.constant 0.109586097 : f32
    %88 = vector.broadcast %cst_96 : f32 to vector<8x16x8xf32>
    %89 = arith.mulf %88, %87 : vector<8x16x8xf32>
    %90 = arith.addf %86, %89 : vector<8x16x8xf32>
    %c11 = arith.constant 11 : index
    %c0_97 = arith.constant 0 : index
    %c0_98 = arith.constant 0 : index
    %91 = vector.load %arg3[%c11, %c0_97, %c0_98] : memref<24x16x8xf32, #tpu.memory_space<vmem>>, vector<8x16x8xf32>
    %cst_99 = arith.constant 0.213444561 : f32
    %92 = vector.broadcast %cst_99 : f32 to vector<8x16x8xf32>
    %93 = arith.mulf %92, %91 : vector<8x16x8xf32>
    %94 = arith.addf %90, %93 : vector<8x16x8xf32>
    %c12 = arith.constant 12 : index
    %c0_100 = arith.constant 0 : index
    %c0_101 = arith.constant 0 : index
    %95 = vector.load %arg3[%c12, %c0_100, %c0_101] : memref<24x16x8xf32, #tpu.memory_space<vmem>>, vector<8x16x8xf32>
    %cst_102 = arith.constant 2.665600e-01 : f32
    %96 = vector.broadcast %cst_102 : f32 to vector<8x16x8xf32>
    %97 = arith.mulf %96, %95 : vector<8x16x8xf32>
    %98 = arith.addf %94, %97 : vector<8x16x8xf32>
    %c13 = arith.constant 13 : index
    %c0_103 = arith.constant 0 : index
    %c0_104 = arith.constant 0 : index
    %99 = vector.load %arg3[%c13, %c0_103, %c0_104] : memref<24x16x8xf32, #tpu.memory_space<vmem>>, vector<8x16x8xf32>
    %cst_105 = arith.constant 0.213444561 : f32
    %100 = vector.broadcast %cst_105 : f32 to vector<8x16x8xf32>
    %101 = arith.mulf %100, %99 : vector<8x16x8xf32>
    %102 = arith.addf %98, %101 : vector<8x16x8xf32>
    %c14 = arith.constant 14 : index
    %c0_106 = arith.constant 0 : index
    %c0_107 = arith.constant 0 : index
    %103 = vector.load %arg3[%c14, %c0_106, %c0_107] : memref<24x16x8xf32, #tpu.memory_space<vmem>>, vector<8x16x8xf32>
    %cst_108 = arith.constant 0.109586097 : f32
    %104 = vector.broadcast %cst_108 : f32 to vector<8x16x8xf32>
    %105 = arith.mulf %104, %103 : vector<8x16x8xf32>
    %106 = arith.addf %102, %105 : vector<8x16x8xf32>
    %c15 = arith.constant 15 : index
    %c0_109 = arith.constant 0 : index
    %c0_110 = arith.constant 0 : index
    %107 = vector.load %arg3[%c15, %c0_109, %c0_110] : memref<24x16x8xf32, #tpu.memory_space<vmem>>, vector<8x16x8xf32>
    %cst_111 = arith.constant 0.0360749736 : f32
    %108 = vector.broadcast %cst_111 : f32 to vector<8x16x8xf32>
    %109 = arith.mulf %108, %107 : vector<8x16x8xf32>
    %110 = arith.addf %106, %109 : vector<8x16x8xf32>
    %c16 = arith.constant 16 : index
    %c0_112 = arith.constant 0 : index
    %c0_113 = arith.constant 0 : index
    %111 = vector.load %arg3[%c16, %c0_112, %c0_113] : memref<24x16x8xf32, #tpu.memory_space<vmem>>, vector<8x16x8xf32>
    %cst_114 = arith.constant 7.614420e-03 : f32
    %112 = vector.broadcast %cst_114 : f32 to vector<8x16x8xf32>
    %113 = arith.mulf %112, %111 : vector<8x16x8xf32>
    %114 = arith.addf %110, %113 : vector<8x16x8xf32>
    %c0_115 = arith.constant 0 : index
    %c4_116 = arith.constant 4 : index
    %c0_117 = arith.constant 0 : index
    %115 = vector.load %arg4[%c0_115, %c4_116, %c0_117] : memref<8x24x8xf32, #tpu.memory_space<vmem>>, vector<8x16x8xf32>
    tpu.vector_store %arg4[%c0_115, %c4_116, %c0_117], %114 {strides = array<i32>} : memref<8x24x8xf32, #tpu.memory_space<vmem>>, vector<8x16x8xf32>,
    %c0_118 = arith.constant 0 : index
    %c0_119 = arith.constant 0 : index
    %c0_120 = arith.constant 0 : index
    %116 = vector.load %arg4[%c0_118, %c0_119, %c0_120] : memref<8x24x8xf32, #tpu.memory_space<vmem>>, vector<8x16x8xf32>
    %cst_121 = arith.constant 7.614420e-03 : f32
    %117 = vector.broadcast %cst_121 : f32 to vector<8x16x8xf32>
    %118 = arith.mulf %117, %116 : vector<8x16x8xf32>
    %c0_122 = arith.constant 0 : index
    %c1_123 = arith.constant 1 : index
    %c0_124 = arith.constant 0 : index
    %119 = vector.load %arg4[%c0_122, %c1_123, %c0_124] : memref<8x24x8xf32, #tpu.memory_space<vmem>>, vector<8x16x8xf32>
    %cst_125 = arith.constant 0.0360749736 : f32
    %120 = vector.broadcast %cst_125 : f32 to vector<8x16x8xf32>
    %121 = arith.mulf %120, %119 : vector<8x16x8xf32>
    %122 = arith.addf %118, %121 : vector<8x16x8xf32>
    %c0_126 = arith.constant 0 : index
    %c2_127 = arith.constant 2 : index
    %c0_128 = arith.constant 0 : index
    %123 = vector.load %arg4[%c0_126, %c2_127, %c0_128] : memref<8x24x8xf32, #tpu.memory_space<vmem>>, vector<8x16x8xf32>
    %cst_129 = arith.constant 0.109586097 : f32
    %124 = vector.broadcast %cst_129 : f32 to vector<8x16x8xf32>
    %125 = arith.mulf %124, %123 : vector<8x16x8xf32>
    %126 = arith.addf %122, %125 : vector<8x16x8xf32>
    %c0_130 = arith.constant 0 : index
    %c3_131 = arith.constant 3 : index
    %c0_132 = arith.constant 0 : index
    %127 = vector.load %arg4[%c0_130, %c3_131, %c0_132] : memref<8x24x8xf32, #tpu.memory_space<vmem>>, vector<8x16x8xf32>
    %cst_133 = arith.constant 0.213444561 : f32
    %128 = vector.broadcast %cst_133 : f32 to vector<8x16x8xf32>
    %129 = arith.mulf %128, %127 : vector<8x16x8xf32>
    %130 = arith.addf %126, %129 : vector<8x16x8xf32>
    %c0_134 = arith.constant 0 : index
    %c4_135 = arith.constant 4 : index
    %c0_136 = arith.constant 0 : index
    %131 = vector.load %arg4[%c0_134, %c4_135, %c0_136] : memref<8x24x8xf32, #tpu.memory_space<vmem>>, vector<8x16x8xf32>
    %cst_137 = arith.constant 2.665600e-01 : f32
    %132 = vector.broadcast %cst_137 : f32 to vector<8x16x8xf32>
    %133 = arith.mulf %132, %131 : vector<8x16x8xf32>
    %134 = arith.addf %130, %133 : vector<8x16x8xf32>
    %c0_138 = arith.constant 0 : index
    %c5_139 = arith.constant 5 : index
    %c0_140 = arith.constant 0 : index
    %135 = vector.load %arg4[%c0_138, %c5_139, %c0_140] : memref<8x24x8xf32, #tpu.memory_space<vmem>>, vector<8x16x8xf32>
    %cst_141 = arith.constant 0.213444561 : f32
    %136 = vector.broadcast %cst_141 : f32 to vector<8x16x8xf32>
    %137 = arith.mulf %136, %135 : vector<8x16x8xf32>
    %138 = arith.addf %134, %137 : vector<8x16x8xf32>
    %c0_142 = arith.constant 0 : index
    %c6_143 = arith.constant 6 : index
    %c0_144 = arith.constant 0 : index
    %139 = vector.load %arg4[%c0_142, %c6_143, %c0_144] : memref<8x24x8xf32, #tpu.memory_space<vmem>>, vector<8x16x8xf32>
    %cst_145 = arith.constant 0.109586097 : f32
    %140 = vector.broadcast %cst_145 : f32 to vector<8x16x8xf32>
    %141 = arith.mulf %140, %139 : vector<8x16x8xf32>
    %142 = arith.addf %138, %141 : vector<8x16x8xf32>
    %c0_146 = arith.constant 0 : index
    %c7_147 = arith.constant 7 : index
    %c0_148 = arith.constant 0 : index
    %143 = vector.load %arg4[%c0_146, %c7_147, %c0_148] : memref<8x24x8xf32, #tpu.memory_space<vmem>>, vector<8x16x8xf32>
    %cst_149 = arith.constant 0.0360749736 : f32
    %144 = vector.broadcast %cst_149 : f32 to vector<8x16x8xf32>
    %145 = arith.mulf %144, %143 : vector<8x16x8xf32>
    %146 = arith.addf %142, %145 : vector<8x16x8xf32>
    %c0_150 = arith.constant 0 : index
    %c8_151 = arith.constant 8 : index
    %c0_152 = arith.constant 0 : index
    %147 = vector.load %arg4[%c0_150, %c8_151, %c0_152] : memref<8x24x8xf32, #tpu.memory_space<vmem>>, vector<8x16x8xf32>
    %cst_153 = arith.constant 7.614420e-03 : f32
    %148 = vector.broadcast %cst_153 : f32 to vector<8x16x8xf32>
    %149 = arith.mulf %148, %147 : vector<8x16x8xf32>
    %150 = arith.addf %146, %149 : vector<8x16x8xf32>
    %c8_154 = arith.constant 8 : index
    %c0_155 = arith.constant 0 : index
    %c0_156 = arith.constant 0 : index
    %151 = vector.load %arg2[%c8_154, %c0_155, %c0_156] : memref<16x16x8xf32, #tpu.memory_space<vmem>>, vector<8x16x8xf32>
    tpu.vector_store %arg2[%c8_154, %c0_155, %c0_156], %150 {strides = array<i32>} : memref<16x16x8xf32, #tpu.memory_space<vmem>>, vector<8x16x8xf32>,
    return
  }
  func.func @transform_0(%arg0: i32) -> (i32, i32, i32) {
    %c0_i32 = arith.constant 0 : i32
    %c0_i32_0 = arith.constant 0 : i32
    %c0_i32_1 = arith.constant 0 : i32
    return %c0_i32, %c0_i32_0, %arg0 : i32, i32, i32
  }
  func.func @transform_1(%arg0: i32) -> (i32, i32, i32) {
    %c0_i32 = arith.constant 0 : i32
    %c0_i32_0 = arith.constant 0 : i32
    %c0_i32_1 = arith.constant 0 : i32
    return %c0_i32, %c0_i32_0, %arg0 : i32, i32, i32
  }
}

</mosaic_0001>

<llo_original>
// kernel: tpu_custom_call.1
$region0: #{tpu_custom_call.1}
  #allocation0 [shape = 'u32[]', space=smem, size = 0x4, offset = 0x4, fixed_abs, tag = 'smem constant byte address 0x4 - core index']
  #allocation1 [shape = 'u32[144,128]{1,0:T(1,128)}', space=vmem, size = 0x12000, scoped, tag = 'internal scratch']
  #allocation2 [shape = 'f32[24,16,8]{2,1,0:T(8,128)}', space=vmem, size = 0x30000, scoped, tag = 'scratch operand']
  #allocation3 [shape = 'f32[8,24,8]{2,1,0:T(8,128)}', space=vmem, size = 0x18000, scoped, tag = 'scratch operand']
  %s0 = inlined_call_operand.vmem [shape: f32[16,16,8], index: 0, kind: input, shape index: {}]
  %s1 = inlined_call_operand.vmem [shape: f32[16,16,8], index: 1, kind: output, shape index: {}]
  %s2 = sld [smem:[#allocation0]]
  $region14: #{tpu_custom_call.1} parent=0
    _
  %s4 = ssub.s32 1, %s2
  %s5 = scalar_select 0, %s4, %s2
  // Predicated region
  $region2: #{tpu_custom_call.1} parent=0 // pred_check
    _
  $region3: #{tpu_custom_call.1} parent=0 // pred_check_branch
    %7 = sbr.rel (0) target = $region5
  $region4: #{tpu_custom_call.1} parent=0 // pred_region
    _
  $region5: #{tpu_custom_call.1} parent=0 // pred_fallthru
    _
  %vm8 = vcmask 64512
  %9 = vst.msk [vmem:[#allocation2] sm:$0xff] %vm8, 0.0
  %10 = vst.msk [vmem:[#allocation2 + $0x8] sm:$0xff] %vm8, 0.0
  %11 = vst.msk [vmem:[#allocation2 + $0x10] sm:$0xff] %vm8, 0.0
  %12 = vst.msk [vmem:[#allocation2 + $0x18] sm:$0xff] %vm8, 0.0
  %13 = vst.msk [vmem:[#allocation2 + $0x20] sm:$0xff] %vm8, 0.0
  %14 = vst.msk [vmem:[#allocation2 + $0x28] sm:$0xff] %vm8, 0.0
  %15 = vst.msk [vmem:[#allocation2 + $0x30] sm:$0xff] %vm8, 0.0
  %16 = vst.msk [vmem:[#allocation2 + $0x38] sm:$0xff] %vm8, 0.0
  %s17 = scalar_lea.vmem [#allocation2], 320
  %18 = vst.msk [vmem:[%s17] sm:$0xff] %vm8, 0.0
  %19 = vst.msk [vmem:[%s17 + $0x8] sm:$0xff] %vm8, 0.0
  %20 = vst.msk [vmem:[%s17 + $0x10] sm:$0xff] %vm8, 0.0
  %21 = vst.msk [vmem:[%s17 + $0x18] sm:$0xff] %vm8, 0.0
  %22 = vst.msk [vmem:[%s17 + $0x20] sm:$0xff] %vm8, 0.0
  %23 = vst.msk [vmem:[%s17 + $0x28] sm:$0xff] %vm8, 0.0
  %24 = vst.msk [vmem:[%s17 + $0x30] sm:$0xff] %vm8, 0.0
  %25 = vst.msk [vmem:[%s17 + $0x38] sm:$0xff] %vm8, 0.0
  %vm26 = vcmask 60416
  %27 = vst.msk [vmem:[#allocation3] sm:$0xf] %vm26, 0.0
  %28 = vst.msk [vmem:[#allocation3 + $0x18] sm:$0xf] %vm26, 0.0
  %29 = vst.msk [vmem:[#allocation3 + $0x30] sm:$0xf] %vm26, 0.0
  %30 = vst.msk [vmem:[#allocation3 + $0x48] sm:$0xf] %vm26, 0.0
  %31 = vst.msk [vmem:[#allocation3 + $0x60] sm:$0xf] %vm26, 0.0
  %32 = vst.msk [vmem:[#allocation3 + $0x78] sm:$0xf] %vm26, 0.0
  %33 = vst.msk [vmem:[#allocation3 + $0x90] sm:$0xf] %vm26, 0.0
  %34 = vst.msk [vmem:[#allocation3 + $0xa8] sm:$0xf] %vm26, 0.0
  %35 = vst.msk [vmem:[#allocation3 + $0x14] sm:$0xf] %vm26, 0.0
  %36 = vst.msk [vmem:[#allocation3 + $0x2c] sm:$0xf] %vm26, 0.0
  %37 = vst.msk [vmem:[#allocation3 + $0x44] sm:$0xf] %vm26, 0.0
  %38 = vst.msk [vmem:[#allocation3 + $0x5c] sm:$0xf] %vm26, 0.0
  %39 = vst.msk [vmem:[#allocation3 + $0x74] sm:$0xf] %vm26, 0.0
  %40 = vst.msk [vmem:[#allocation3 + $0x8c] sm:$0xf] %vm26, 0.0
  %41 = vst.msk [vmem:[#allocation3 + $0xa4] sm:$0xf] %vm26, 0.0
  %42 = vst.msk [vmem:[#allocation3 + $0xbc] sm:$0xf] %vm26, 0.0
  %v43 = vld [vmem:[%s0] sm:$0xff]
  %v44 = vld [vmem:[%s0 + $0x8] sm:$0xff]
  %v45 = vld [vmem:[%s0 + $0x10] sm:$0xff]
  %v46 = vld [vmem:[%s0 + $0x18] sm:$0xff]
  %v47 = vld [vmem:[%s0 + $0x20] sm:$0xff]
  %v48 = vld [vmem:[%s0 + $0x28] sm:$0xff]
  %v49 = vld [vmem:[%s0 + $0x30] sm:$0xff]
  %v50 = vld [vmem:[%s0 + $0x38] sm:$0xff]
  %v51 = vld [vmem:[%s0 + $0x40] sm:$0xff]
  %v52 = vld [vmem:[%s0 + $0x48] sm:$0xff]
  %v53 = vld [vmem:[%s0 + $0x50] sm:$0xff]
  %v54 = vld [vmem:[%s0 + $0x58] sm:$0xff]
  %v55 = vld [vmem:[%s0 + $0x60] sm:$0xff]
  %v56 = vld [vmem:[%s0 + $0x68] sm:$0xff]
  %v57 = vld [vmem:[%s0 + $0x70] sm:$0xff]
  %v58 = vld [vmem:[%s0 + $0x78] sm:$0xff]
  %v59 = vld [vmem:[%s0 + $0x80] sm:$0xff]
  %v60 = vld [vmem:[%s0 + $0x88] sm:$0xff]
  %v61 = vld [vmem:[%s0 + $0x90] sm:$0xff]
  %v62 = vld [vmem:[%s0 + $0x98] sm:$0xff]
  %v63 = vld [vmem:[%s0 + $0xa0] sm:$0xff]
  %v64 = vld [vmem:[%s0 + $0xa8] sm:$0xff]
  %v65 = vld [vmem:[%s0 + $0xb0] sm:$0xff]
  %v66 = vld [vmem:[%s0 + $0xb8] sm:$0xff]
  %v67 = vld [vmem:[%s0 + $0xc0] sm:$0xff]
  %v68 = vld [vmem:[%s0 + $0xc8] sm:$0xff]
  %v69 = vld [vmem:[%s0 + $0xd0] sm:$0xff]
  %v70 = vld [vmem:[%s0 + $0xd8] sm:$0xff]
  %v71 = vld [vmem:[%s0 + $0xe0] sm:$0xff]
  %v72 = vld [vmem:[%s0 + $0xe8] sm:$0xff]
  %v73 = vld [vmem:[%s0 + $0xf0] sm:$0xff]
  %v74 = vld [vmem:[%s0 + $0xf8] sm:$0xff]
  %s75 = scalar_lea.vmem [#allocation2], 64
  %76 = vst.msk [vmem:[%s75] sm:$0xff] %vm8, %v43
  %77 = vst.msk [vmem:[%s75 + $0x8] sm:$0xff] %vm8, %v44
  %78 = vst.msk [vmem:[%s75 + $0x10] sm:$0xff] %vm8, %v45
  %79 = vst.msk [vmem:[%s75 + $0x18] sm:$0xff] %vm8, %v46
  %80 = vst.msk [vmem:[%s75 + $0x20] sm:$0xff] %vm8, %v47
  %81 = vst.msk [vmem:[%s75 + $0x28] sm:$0xff] %vm8, %v48
  %82 = vst.msk [vmem:[%s75 + $0x30] sm:$0xff] %vm8, %v49
  %83 = vst.msk [vmem:[%s75 + $0x38] sm:$0xff] %vm8, %v50
  %84 = vst.msk [vmem:[%s75 + $0x40] sm:$0xff] %vm8, %v51
  %85 = vst.msk [vmem:[%s75 + $0x48] sm:$0xff] %vm8, %v52
  %86 = vst.msk [vmem:[%s75 + $0x50] sm:$0xff] %vm8, %v53
  %87 = vst.msk [vmem:[%s75 + $0x58] sm:$0xff] %vm8, %v54
  %88 = vst.msk [vmem:[%s75 + $0x60] sm:$0xff] %vm8, %v55
  %89 = vst.msk [vmem:[%s75 + $0x68] sm:$0xff] %vm8, %v56
  %90 = vst.msk [vmem:[%s75 + $0x70] sm:$0xff] %vm8, %v57
  %91 = vst.msk [vmem:[%s75 + $0x78] sm:$0xff] %vm8, %v58
  %92 = vst.msk [vmem:[%s75 + $0x80] sm:$0xff] %vm8, %v59
  %93 = vst.msk [vmem:[%s75 + $0x88] sm:$0xff] %vm8, %v60
  %94 = vst.msk [vmem:[%s75 + $0x90] sm:$0xff] %vm8, %v61
  %95 = vst.msk [vmem:[%s75 + $0x98] sm:$0xff] %vm8, %v62
  %96 = vst.msk [vmem:[%s75 + $0xa0] sm:$0xff] %vm8, %v63
  %97 = vst.msk [vmem:[%s75 + $0xa8] sm:$0xff] %vm8, %v64
  %98 = vst.msk [vmem:[%s75 + $0xb0] sm:$0xff] %vm8, %v65
  %99 = vst.msk [vmem:[%s75 + $0xb8] sm:$0xff] %vm8, %v66
  %100 = vst.msk [vmem:[%s75 + $0xc0] sm:$0xff] %vm8, %v67
  %101 = vst.msk [vmem:[%s75 + $0xc8] sm:$0xff] %vm8, %v68
  %102 = vst.msk [vmem:[%s75 + $0xd0] sm:$0xff] %vm8, %v69
  %103 = vst.msk [vmem:[%s75 + $0xd8] sm:$0xff] %vm8, %v70
  %104 = vst.msk [vmem:[%s75 + $0xe0] sm:$0xff] %vm8, %v71
  %105 = vst.msk [vmem:[%s75 + $0xe8] sm:$0xff] %vm8, %v72
  %106 = vst.msk [vmem:[%s75 + $0xf0] sm:$0xff] %vm8, %v73
  %107 = vst.msk [vmem:[%s75 + $0xf8] sm:$0xff] %vm8, %v74
  %v108 = vld [vmem:[#allocation2] sm:$0xff]
  %v109 = vld [vmem:[#allocation2 + $0x8] sm:$0xff]
  %v110 = vld [vmem:[#allocation2 + $0x10] sm:$0xff]
  %v111 = vld [vmem:[#allocation2 + $0x18] sm:$0xff]
  %v112 = vld [vmem:[#allocation2 + $0x20] sm:$0xff]
  %v113 = vld [vmem:[#allocation2 + $0x28] sm:$0xff]
  %v114 = vld [vmem:[#allocation2 + $0x30] sm:$0xff]
  %v115 = vld [vmem:[#allocation2 + $0x38] sm:$0xff]
  %v116 = vld [vmem:[#allocation2 + $0x40] sm:$0xff]
  %v117 = vld [vmem:[#allocation2 + $0x48] sm:$0xff]
  %v118 = vld [vmem:[#allocation2 + $0x50] sm:$0xff]
  %v119 = vld [vmem:[#allocation2 + $0x58] sm:$0xff]
  %v120 = vld [vmem:[#allocation2 + $0x60] sm:$0xff]
  %v121 = vld [vmem:[#allocation2 + $0x68] sm:$0xff]
  %v122 = vld [vmem:[#allocation2 + $0x70] sm:$0xff]
  %v123 = vld [vmem:[#allocation2 + $0x78] sm:$0xff]
  %v124 = vmul.f32 %v108, 0.00761442
  %v125 = vmul.f32 %v109, 0.00761442
  %v126 = vmul.f32 %v110, 0.00761442
  %v127 = vmul.f32 %v111, 0.00761442
  %v128 = vmul.f32 %v112, 0.00761442
  %v129 = vmul.f32 %v113, 0.00761442
  %v130 = vmul.f32 %v114, 0.00761442
  %v131 = vmul.f32 %v115, 0.00761442
  %v132 = vmul.f32 %v116, 0.00761442
  %v133 = vmul.f32 %v117, 0.00761442
  %v134 = vmul.f32 %v118, 0.00761442
  %v135 = vmul.f32 %v119, 0.00761442
  %v136 = vmul.f32 %v120, 0.00761442
  %v137 = vmul.f32 %v121, 0.00761442
  %v138 = vmul.f32 %v122, 0.00761442
  %v139 = vmul.f32 %v123, 0.00761442
  %s140 = scalar_lea.vmem [#allocation2], 16
  %v141 = vld [vmem:[%s140] sm:$0xff]
  %v142 = vld [vmem:[%s140 + $0x8] sm:$0xff]
  %v143 = vld [vmem:[%s140 + $0x10] sm:$0xff]
  %v144 = vld [vmem:[%s140 + $0x18] sm:$0xff]
  %v145 = vld [vmem:[%s140 + $0x20] sm:$0xff]
  %v146 = vld [vmem:[%s140 + $0x28] sm:$0xff]
  %v147 = vld [vmem:[%s140 + $0x30] sm:$0xff]
  %v148 = vld [vmem:[%s140 + $0x38] sm:$0xff]
  %v149 = vld [vmem:[%s140 + $0x40] sm:$0xff]
  %v150 = vld [vmem:[%s140 + $0x48] sm:$0xff]
  %v151 = vld [vmem:[%s140 + $0x50] sm:$0xff]
  %v152 = vld [vmem:[%s140 + $0x58] sm:$0xff]
  %v153 = vld [vmem:[%s140 + $0x60] sm:$0xff]
  %v154 = vld [vmem:[%s140 + $0x68] sm:$0xff]
  %v155 = vld [vmem:[%s140 + $0x70] sm:$0xff]
  %v156 = vld [vmem:[%s140 + $0x78] sm:$0xff]
  %v157 = vmul.f32 %v141, 0.036074974
  %v158 = vmul.f32 %v142, 0.036074974
  %v159 = vmul.f32 %v143, 0.036074974
  %v160 = vmul.f32 %v144, 0.036074974
  %v161 = vmul.f32 %v145, 0.036074974
  %v162 = vmul.f32 %v146, 0.036074974
  %v163 = vmul.f32 %v147, 0.036074974
  %v164 = vmul.f32 %v148, 0.036074974
  %v165 = vmul.f32 %v149, 0.036074974
  %v166 = vmul.f32 %v150, 0.036074974
  %v167 = vmul.f32 %v151, 0.036074974
  %v168 = vmul.f32 %v152, 0.036074974
  %v169 = vmul.f32 %v153, 0.036074974
  %v170 = vmul.f32 %v154, 0.036074974
  %v171 = vmul.f32 %v155, 0.036074974
  %v172 = vmul.f32 %v156, 0.036074974
  %v173 = vadd.f32 %v124, %v157
  %v174 = vadd.f32 %v125, %v158
  %v175 = vadd.f32 %v126, %v159
  %v176 = vadd.f32 %v127, %v160
  %v177 = vadd.f32 %v128, %v161
  %v178 = vadd.f32 %v129, %v162
  %v179 = vadd.f32 %v130, %v163
  %v180 = vadd.f32 %v131, %v164
  %v181 = vadd.f32 %v132, %v165
  %v182 = vadd.f32 %v133, %v166
  %v183 = vadd.f32 %v134, %v167
  %v184 = vadd.f32 %v135, %v168
  %v185 = vadd.f32 %v136, %v169
  %v186 = vadd.f32 %v137, %v170
  %v187 = vadd.f32 %v138, %v171
  %v188 = vadd.f32 %v139, %v172
  %s189 = scalar_lea.vmem [#allocation2], 32
  %v190 = vld [vmem:[%s189] sm:$0xff]
  %v191 = vld [vmem:[%s189 + $0x8] sm:$0xff]
  %v192 = vld [vmem:[%s189 + $0x10] sm:$0xff]
  %v193 = vld [vmem:[%s189 + $0x18] sm:$0xff]
  %v194 = vld [vmem:[%s189 + $0x20] sm:$0xff]
  %v195 = vld [vmem:[%s189 + $0x28] sm:$0xff]
  %v196 = vld [vmem:[%s189 + $0x30] sm:$0xff]
  %v197 = vld [vmem:[%s189 + $0x38] sm:$0xff]
  %v198 = vld [vmem:[%s189 + $0x40] sm:$0xff]
  %v199 = vld [vmem:[%s189 + $0x48] sm:$0xff]
  %v200 = vld [vmem:[%s189 + $0x50] sm:$0xff]
  %v201 = vld [vmem:[%s189 + $0x58] sm:$0xff]
  %v202 = vld [vmem:[%s189 + $0x60] sm:$0xff]
  %v203 = vld [vmem:[%s189 + $0x68] sm:$0xff]
  %v204 = vld [vmem:[%s189 + $0x70] sm:$0xff]
  %v205 = vld [vmem:[%s189 + $0x78] sm:$0xff]
  %v206 = vmul.f32 %v190, 0.1095861
  %v207 = vmul.f32 %v191, 0.1095861
  %v208 = vmul.f32 %v192, 0.1095861
  %v209 = vmul.f32 %v193, 0.1095861
  %v210 = vmul.f32 %v194, 0.1095861
  %v211 = vmul.f32 %v195, 0.1095861
  %v212 = vmul.f32 %v196, 0.1095861
  %v213 = vmul.f32 %v197, 0.1095861
  %v214 = vmul.f32 %v198, 0.1095861
  %v215 = vmul.f32 %v199, 0.1095861
  %v216 = vmul.f32 %v200, 0.1095861
  %v217 = vmul.f32 %v201, 0.1095861
  %v218 = vmul.f32 %v202, 0.1095861
  %v219 = vmul.f32 %v203, 0.1095861
  %v220 = vmul.f32 %v204, 0.1095861
  %v221 = vmul.f32 %v205, 0.1095861
  %v222 = vadd.f32 %v173, %v206
  %v223 = vadd.f32 %v174, %v207
  %v224 = vadd.f32 %v175, %v208
  %v225 = vadd.f32 %v176, %v209
  %v226 = vadd.f32 %v177, %v210
  %v227 = vadd.f32 %v178, %v211
  %v228 = vadd.f32 %v179, %v212
  %v229 = vadd.f32 %v180, %v213
  %v230 = vadd.f32 %v181, %v214
  %v231 = vadd.f32 %v182, %v215
  %v232 = vadd.f32 %v183, %v216
  %v233 = vadd.f32 %v184, %v217
  %v234 = vadd.f32 %v185, %v218
  %v235 = vadd.f32 %v186, %v219
  %v236 = vadd.f32 %v187, %v220
  %v237 = vadd.f32 %v188, %v221
  %s238 = scalar_lea.vmem [#allocation2], 48
  %v239 = vld [vmem:[%s238] sm:$0xff]
  %v240 = vld [vmem:[%s238 + $0x8] sm:$0xff]
  %v241 = vld [vmem:[%s238 + $0x10] sm:$0xff]
  %v242 = vld [vmem:[%s238 + $0x18] sm:$0xff]
  %v243 = vld [vmem:[%s238 + $0x20] sm:$0xff]
  %v244 = vld [vmem:[%s238 + $0x28] sm:$0xff]
  %v245 = vld [vmem:[%s238 + $0x30] sm:$0xff]
  %v246 = vld [vmem:[%s238 + $0x38] sm:$0xff]
  %v247 = vld [vmem:[%s238 + $0x40] sm:$0xff]
  %v248 = vld [vmem:[%s238 + $0x48] sm:$0xff]
  %v249 = vld [vmem:[%s238 + $0x50] sm:$0xff]
  %v250 = vld [vmem:[%s238 + $0x58] sm:$0xff]
  %v251 = vld [vmem:[%s238 + $0x60] sm:$0xff]
  %v252 = vld [vmem:[%s238 + $0x68] sm:$0xff]
  %v253 = vld [vmem:[%s238 + $0x70] sm:$0xff]
  %v254 = vld [vmem:[%s238 + $0x78] sm:$0xff]
  %v255 = vmul.f32 %v239, 0.21344456
  %v256 = vmul.f32 %v240, 0.21344456
  %v257 = vmul.f32 %v241, 0.21344456
  %v258 = vmul.f32 %v242, 0.21344456
  %v259 = vmul.f32 %v243, 0.21344456
  %v260 = vmul.f32 %v244, 0.21344456
  %v261 = vmul.f32 %v245, 0.21344456
  %v262 = vmul.f32 %v246, 0.21344456
  %v263 = vmul.f32 %v247, 0.21344456
  %v264 = vmul.f32 %v248, 0.21344456
  %v265 = vmul.f32 %v249, 0.21344456
  %v266 = vmul.f32 %v250, 0.21344456
  %v267 = vmul.f32 %v251, 0.21344456
  %v268 = vmul.f32 %v252, 0.21344456
  %v269 = vmul.f32 %v253, 0.21344456
  %v270 = vmul.f32 %v254, 0.21344456
  %v271 = vadd.f32 %v222, %v255
  %v272 = vadd.f32 %v223, %v256
  %v273 = vadd.f32 %v224, %v257
  %v274 = vadd.f32 %v225, %v258
  %v275 = vadd.f32 %v226, %v259
  %v276 = vadd.f32 %v227, %v260
  %v277 = vadd.f32 %v228, %v261
  %v278 = vadd.f32 %v229, %v262
  %v279 = vadd.f32 %v230, %v263
  %v280 = vadd.f32 %v231, %v264
  %v281 = vadd.f32 %v232, %v265
  %v282 = vadd.f32 %v233, %v266
  %v283 = vadd.f32 %v234, %v267
  %v284 = vadd.f32 %v235, %v268
  %v285 = vadd.f32 %v236, %v269
  %v286 = vadd.f32 %v237, %v270
  %v287 = vld [vmem:[%s75] sm:$0xff]
  %v288 = vld [vmem:[%s75 + $0x8] sm:$0xff]
  %v289 = vld [vmem:[%s75 + $0x10] sm:$0xff]
  %v290 = vld [vmem:[%s75 + $0x18] sm:$0xff]
  %v291 = vld [vmem:[%s75 + $0x20] sm:$0xff]
  %v292 = vld [vmem:[%s75 + $0x28] sm:$0xff]
  %v293 = vld [vmem:[%s75 + $0x30] sm:$0xff]
  %v294 = vld [vmem:[%s75 + $0x38] sm:$0xff]
  %v295 = vld [vmem:[%s75 + $0x40] sm:$0xff]
  %v296 = vld [vmem:[%s75 + $0x48] sm:$0xff]
  %v297 = vld [vmem:[%s75 + $0x50] sm:$0xff]
  %v298 = vld [vmem:[%s75 + $0x58] sm:$0xff]
  %v299 = vld [vmem:[%s75 + $0x60] sm:$0xff]
  %v300 = vld [vmem:[%s75 + $0x68] sm:$0xff]
  %v301 = vld [vmem:[%s75 + $0x70] sm:$0xff]
  %v302 = vld [vmem:[%s75 + $0x78] sm:$0xff]
  %v303 = vmul.f32 %v287, 0.26656
  %v304 = vmul.f32 %v288, 0.26656
  %v305 = vmul.f32 %v289, 0.26656
  %v306 = vmul.f32 %v290, 0.26656
  %v307 = vmul.f32 %v291, 0.26656
  %v308 = vmul.f32 %v292, 0.26656
  %v309 = vmul.f32 %v293, 0.26656
  %v310 = vmul.f32 %v294, 0.26656
  %v311 = vmul.f32 %v295, 0.26656
  %v312 = vmul.f32 %v296, 0.26656
  %v313 = vmul.f32 %v297, 0.26656
  %v314 = vmul.f32 %v298, 0.26656
  %v315 = vmul.f32 %v299, 0.26656
  %v316 = vmul.f32 %v300, 0.26656
  %v317 = vmul.f32 %v301, 0.26656
  %v318 = vmul.f32 %v302, 0.26656
  %v319 = vadd.f32 %v271, %v303
  %v320 = vadd.f32 %v272, %v304
  %v321 = vadd.f32 %v273, %v305
  %v322 = vadd.f32 %v274, %v306
  %v323 = vadd.f32 %v275, %v307
  %v324 = vadd.f32 %v276, %v308
  %v325 = vadd.f32 %v277, %v309
  %v326 = vadd.f32 %v278, %v310
  %v327 = vadd.f32 %v279, %v311
  %v328 = vadd.f32 %v280, %v312
  %v329 = vadd.f32 %v281, %v313
  %v330 = vadd.f32 %v282, %v314
  %v331 = vadd.f32 %v283, %v315
  %v332 = vadd.f32 %v284, %v316
  %v333 = vadd.f32 %v285, %v317
  %v334 = vadd.f32 %v286, %v318
  %s335 = scalar_lea.vmem [#allocation2], 80
  %v336 = vld [vmem:[%s335] sm:$0xff]
  %v337 = vld [vmem:[%s335 + $0x8] sm:$0xff]
  %v338 = vld [vmem:[%s335 + $0x10] sm:$0xff]
  %v339 = vld [vmem:[%s335 + $0x18] sm:$0xff]
  %v340 = vld [vmem:[%s335 + $0x20] sm:$0xff]
  %v341 = vld [vmem:[%s335 + $0x28] sm:$0xff]
  %v342 = vld [vmem:[%s335 + $0x30] sm:$0xff]
  %v343 = vld [vmem:[%s335 + $0x38] sm:$0xff]
  %v344 = vld [vmem:[%s335 + $0x40] sm:$0xff]
  %v345 = vld [vmem:[%s335 + $0x48] sm:$0xff]
  %v346 = vld [vmem:[%s335 + $0x50] sm:$0xff]
  %v347 = vld [vmem:[%s335 + $0x58] sm:$0xff]
  %v348 = vld [vmem:[%s335 + $0x60] sm:$0xff]
  %v349 = vld [vmem:[%s335 + $0x68] sm:$0xff]
  %v350 = vld [vmem:[%s335 + $0x70] sm:$0xff]
  %v351 = vld [vmem:[%s335 + $0x78] sm:$0xff]
  %v352 = vmul.f32 %v336, 0.21344456
  %v353 = vmul.f32 %v337, 0.21344456
  %v354 = vmul.f32 %v338, 0.21344456
  %v355 = vmul.f32 %v339, 0.21344456
  %v356 = vmul.f32 %v340, 0.21344456
  %v357 = vmul.f32 %v341, 0.21344456
  %v358 = vmul.f32 %v342, 0.21344456
  %v359 = vmul.f32 %v343, 0.21344456
  %v360 = vmul.f32 %v344, 0.21344456
  %v361 = vmul.f32 %v345, 0.21344456
  %v362 = vmul.f32 %v346, 0.21344456
  %v363 = vmul.f32 %v347, 0.21344456
  %v364 = vmul.f32 %v348, 0.21344456
  %v365 = vmul.f32 %v349, 0.21344456
  %v366 = vmul.f32 %v350, 0.21344456
  %v367 = vmul.f32 %v351, 0.21344456
  %v368 = vadd.f32 %v319, %v352
  %v369 = vadd.f32 %v320, %v353
  %v370 = vadd.f32 %v321, %v354
  %v371 = vadd.f32 %v322, %v355
  %v372 = vadd.f32 %v323, %v356
  %v373 = vadd.f32 %v324, %v357
  %v374 = vadd.f32 %v325, %v358
  %v375 = vadd.f32 %v326, %v359
  %v376 = vadd.f32 %v327, %v360
  %v377 = vadd.f32 %v328, %v361
  %v378 = vadd.f32 %v329, %v362
  %v379 = vadd.f32 %v330, %v363
  %v380 = vadd.f32 %v331, %v364
  %v381 = vadd.f32 %v332, %v365
  %v382 = vadd.f32 %v333, %v366
  %v383 = vadd.f32 %v334, %v367
  %s384 = scalar_lea.vmem [#allocation2], 96
  %v385 = vld [vmem:[%s384] sm:$0xff]
  %v386 = vld [vmem:[%s384 + $0x8] sm:$0xff]
  %v387 = vld [vmem:[%s384 + $0x10] sm:$0xff]
  %v388 = vld [vmem:[%s384 + $0x18] sm:$0xff]
  %v389 = vld [vmem:[%s384 + $0x20] sm:$0xff]
  %v390 = vld [vmem:[%s384 + $0x28] sm:$0xff]
  %v391 = vld [vmem:[%s384 + $0x30] sm:$0xff]
  %v392 = vld [vmem:[%s384 + $0x38] sm:$0xff]
  %v393 = vld [vmem:[%s384 + $0x40] sm:$0xff]
  %v394 = vld [vmem:[%s384 + $0x48] sm:$0xff]
  %v395 = vld [vmem:[%s384 + $0x50] sm:$0xff]
  %v396 = vld [vmem:[%s384 + $0x58] sm:$0xff]
  %v397 = vld [vmem:[%s384 + $0x60] sm:$0xff]
  %v398 = vld [vmem:[%s384 + $0x68] sm:$0xff]
  %v399 = vld [vmem:[%s384 + $0x70] sm:$0xff]
  %v400 = vld [vmem:[%s384 + $0x78] sm:$0xff]
  %v401 = vmul.f32 %v385, 0.1095861
  %v402 = vmul.f32 %v386, 0.1095861
  %v403 = vmul.f32 %v387, 0.1095861
  %v404 = vmul.f32 %v388, 0.1095861
  %v405 = vmul.f32 %v389, 0.1095861
  %v406 = vmul.f32 %v390, 0.1095861
  %v407 = vmul.f32 %v391, 0.1095861
  %v408 = vmul.f32 %v392, 0.1095861
  %v409 = vmul.f32 %v393, 0.1095861
  %v410 = vmul.f32 %v394, 0.1095861
  %v411 = vmul.f32 %v395, 0.1095861
  %v412 = vmul.f32 %v396, 0.1095861
  %v413 = vmul.f32 %v397, 0.1095861
  %v414 = vmul.f32 %v398, 0.1095861
  %v415 = vmul.f32 %v399, 0.1095861
  %v416 = vmul.f32 %v400, 0.1095861
  %v417 = vadd.f32 %v368, %v401
  %v418 = vadd.f32 %v369, %v402
  %v419 = vadd.f32 %v370, %v403
  %v420 = vadd.f32 %v371, %v404
  %v421 = vadd.f32 %v372, %v405
  %v422 = vadd.f32 %v373, %v406
  %v423 = vadd.f32 %v374, %v407
  %v424 = vadd.f32 %v375, %v408
  %v425 = vadd.f32 %v376, %v409
  %v426 = vadd.f32 %v377, %v410
  %v427 = vadd.f32 %v378, %v411
  %v428 = vadd.f32 %v379, %v412
  %v429 = vadd.f32 %v380, %v413
  %v430 = vadd.f32 %v381, %v414
  %v431 = vadd.f32 %v382, %v415
  %v432 = vadd.f32 %v383, %v416
  %s433 = scalar_lea.vmem [#allocation2], 112
  %v434 = vld [vmem:[%s433] sm:$0xff]
  %v435 = vld [vmem:[%s433 + $0x8] sm:$0xff]
  %v436 = vld [vmem:[%s433 + $0x10] sm:$0xff]
  %v437 = vld [vmem:[%s433 + $0x18] sm:$0xff]
  %v438 = vld [vmem:[%s433 + $0x20] sm:$0xff]
  %v439 = vld [vmem:[%s433 + $0x28] sm:$0xff]
  %v440 = vld [vmem:[%s433 + $0x30] sm:$0xff]
  %v441 = vld [vmem:[%s433 + $0x38] sm:$0xff]
  %v442 = vld [vmem:[%s433 + $0x40] sm:$0xff]
  %v443 = vld [vmem:[%s433 + $0x48] sm:$0xff]
  %v444 = vld [vmem:[%s433 + $0x50] sm:$0xff]
  %v445 = vld [vmem:[%s433 + $0x58] sm:$0xff]
  %v446 = vld [vmem:[%s433 + $0x60] sm:$0xff]
  %v447 = vld [vmem:[%s433 + $0x68] sm:$0xff]
  %v448 = vld [vmem:[%s433 + $0x70] sm:$0xff]
  %v449 = vld [vmem:[%s433 + $0x78] sm:$0xff]
  %v450 = vmul.f32 %v434, 0.036074974
  %v451 = vmul.f32 %v435, 0.036074974
  %v452 = vmul.f32 %v436, 0.036074974
  %v453 = vmul.f32 %v437, 0.036074974
  %v454 = vmul.f32 %v438, 0.036074974
  %v455 = vmul.f32 %v439, 0.036074974
  %v456 = vmul.f32 %v440, 0.036074974
  %v457 = vmul.f32 %v441, 0.036074974
  %v458 = vmul.f32 %v442, 0.036074974
  %v459 = vmul.f32 %v443, 0.036074974
  %v460 = vmul.f32 %v444, 0.036074974
  %v461 = vmul.f32 %v445, 0.036074974
  %v462 = vmul.f32 %v446, 0.036074974
  %v463 = vmul.f32 %v447, 0.036074974
  %v464 = vmul.f32 %v448, 0.036074974
  %v465 = vmul.f32 %v449, 0.036074974
  %v466 = vadd.f32 %v417, %v450
  %v467 = vadd.f32 %v418, %v451
  %v468 = vadd.f32 %v419, %v452
  %v469 = vadd.f32 %v420, %v453
  %v470 = vadd.f32 %v421, %v454
  %v471 = vadd.f32 %v422, %v455
  %v472 = vadd.f32 %v423, %v456
  %v473 = vadd.f32 %v424, %v457
  %v474 = vadd.f32 %v425, %v458
  %v475 = vadd.f32 %v426, %v459
  %v476 = vadd.f32 %v427, %v460
  %v477 = vadd.f32 %v428, %v461
  %v478 = vadd.f32 %v429, %v462
  %v479 = vadd.f32 %v430, %v463
  %v480 = vadd.f32 %v431, %v464
  %v481 = vadd.f32 %v432, %v465
  %s482 = scalar_lea.vmem [#allocation2], 128
  %v483 = vld [vmem:[%s482] sm:$0xff]
  %v484 = vld [vmem:[%s482 + $0x8] sm:$0xff]
  %v485 = vld [vmem:[%s482 + $0x10] sm:$0xff]
  %v486 = vld [vmem:[%s482 + $0x18] sm:$0xff]
  %v487 = vld [vmem:[%s482 + $0x20] sm:$0xff]
  %v488 = vld [vmem:[%s482 + $0x28] sm:$0xff]
  %v489 = vld [vmem:[%s482 + $0x30] sm:$0xff]
  %v490 = vld [vmem:[%s482 + $0x38] sm:$0xff]
  %v491 = vld [vmem:[%s482 + $0x40] sm:$0xff]
  %v492 = vld [vmem:[%s482 + $0x48] sm:$0xff]
  %v493 = vld [vmem:[%s482 + $0x50] sm:$0xff]
  %v494 = vld [vmem:[%s482 + $0x58] sm:$0xff]
  %v495 = vld [vmem:[%s482 + $0x60] sm:$0xff]
  %v496 = vld [vmem:[%s482 + $0x68] sm:$0xff]
  %v497 = vld [vmem:[%s482 + $0x70] sm:$0xff]
  %v498 = vld [vmem:[%s482 + $0x78] sm:$0xff]
  %v499 = vmul.f32 %v483, 0.00761442
  %v500 = vmul.f32 %v484, 0.00761442
  %v501 = vmul.f32 %v485, 0.00761442
  %v502 = vmul.f32 %v486, 0.00761442
  %v503 = vmul.f32 %v487, 0.00761442
  %v504 = vmul.f32 %v488, 0.00761442
  %v505 = vmul.f32 %v489, 0.00761442
  %v506 = vmul.f32 %v490, 0.00761442
  %v507 = vmul.f32 %v491, 0.00761442
  %v508 = vmul.f32 %v492, 0.00761442
  %v509 = vmul.f32 %v493, 0.00761442
  %v510 = vmul.f32 %v494, 0.00761442
  %v511 = vmul.f32 %v495, 0.00761442
  %v512 = vmul.f32 %v496, 0.00761442
  %v513 = vmul.f32 %v497, 0.00761442
  %v514 = vmul.f32 %v498, 0.00761442
  %v515 = vadd.f32 %v466, %v499
  %v516 = vadd.f32 %v467, %v500
  %v517 = vadd.f32 %v468, %v501
  %v518 = vadd.f32 %v469, %v502
  %v519 = vadd.f32 %v470, %v503
  %v520 = vadd.f32 %v471, %v504
  %v521 = vadd.f32 %v472, %v505
  %v522 = vadd.f32 %v473, %v506
  %v523 = vadd.f32 %v474, %v507
  %v524 = vadd.f32 %v475, %v508
  %v525 = vadd.f32 %v476, %v509
  %v526 = vadd.f32 %v477, %v510
  %v527 = vadd.f32 %v478, %v511
  %v528 = vadd.f32 %v479, %v512
  %v529 = vadd.f32 %v480, %v513
  %v530 = vadd.f32 %v481, %v514
  %531 = vst.msk [vmem:[#allocation3 + $0x4] sm:$0xff] %vm8, %v515
  %532 = vst.msk [vmem:[#allocation3 + $0xc] sm:$0xff] %vm8, %v516
  %533 = vst.msk [vmem:[#allocation3 + $0x1c] sm:$0xff] %vm8, %v517
  %534 = vst.msk [vmem:[#allocation3 + $0x24] sm:$0xff] %vm8, %v518
  %535 = vst.msk [vmem:[#allocation3 + $0x34] sm:$0xff] %vm8, %v519
  %536 = vst.msk [vmem:[#allocation3 + $0x3c] sm:$0xff] %vm8, %v520
  %537 = vst.msk [vmem:[#allocation3 + $0x4c] sm:$0xff] %vm8, %v521
  %538 = vst.msk [vmem:[#allocation3 + $0x54] sm:$0xff] %vm8, %v522
  %539 = vst.msk [vmem:[#allocation3 + $0x64] sm:$0xff] %vm8, %v523
  %540 = vst.msk [vmem:[#allocation3 + $0x6c] sm:$0xff] %vm8, %v524
  %541 = vst.msk [vmem:[#allocation3 + $0x7c] sm:$0xff] %vm8, %v525
  %542 = vst.msk [vmem:[#allocation3 + $0x84] sm:$0xff] %vm8, %v526
  %543 = vst.msk [vmem:[#allocation3 + $0x94] sm:$0xff] %vm8, %v527
  %544 = vst.msk [vmem:[#allocation3 + $0x9c] sm:$0xff] %vm8, %v528
  %545 = vst.msk [vmem:[#allocation3 + $0xac] sm:$0xff] %vm8, %v529
  %546 = vst.msk [vmem:[#allocation3 + $0xb4] sm:$0xff] %vm8, %v530
  %v547 = vld [vmem:[#allocation3] sm:$0xff]
  %v548 = vld [vmem:[#allocation3 + $0x8] sm:$0xff]
  %v549 = vld [vmem:[#allocation3 + $0x18] sm:$0xff]
  %v550 = vld [vmem:[#allocation3 + $0x20] sm:$0xff]
  %v551 = vld [vmem:[#allocation3 + $0x30] sm:$0xff]
  %v552 = vld [vmem:[#allocation3 + $0x38] sm:$0xff]
  %v553 = vld [vmem:[#allocation3 + $0x48] sm:$0xff]
  %v554 = vld [vmem:[#allocation3 + $0x50] sm:$0xff]
  %v555 = vld [vmem:[#allocation3 + $0x60] sm:$0xff]
  %v556 = vld [vmem:[#allocation3 + $0x68] sm:$0xff]
  %v557 = vld [vmem:[#allocation3 + $0x78] sm:$0xff]
  %v558 = vld [vmem:[#allocation3 + $0x80] sm:$0xff]
  %v559 = vld [vmem:[#allocation3 + $0x90] sm:$0xff]
  %v560 = vld [vmem:[#allocation3 + $0x98] sm:$0xff]
  %v561 = vld [vmem:[#allocation3 + $0xa8] sm:$0xff]
  %v562 = vld [vmem:[#allocation3 + $0xb0] sm:$0xff]
  %v563 = vmul.f32 %v547, 0.00761442
  %v564 = vmul.f32 %v548, 0.00761442
  %v565 = vmul.f32 %v549, 0.00761442
  %v566 = vmul.f32 %v550, 0.00761442
  %v567 = vmul.f32 %v551, 0.00761442
  %v568 = vmul.f32 %v552, 0.00761442
  %v569 = vmul.f32 %v553, 0.00761442
  %v570 = vmul.f32 %v554, 0.00761442
  %v571 = vmul.f32 %v555, 0.00761442
  %v572 = vmul.f32 %v556, 0.00761442
  %v573 = vmul.f32 %v557, 0.00761442
  %v574 = vmul.f32 %v558, 0.00761442
  %v575 = vmul.f32 %v559, 0.00761442
  %v576 = vmul.f32 %v560, 0.00761442
  %v577 = vmul.f32 %v561, 0.00761442
  %v578 = vmul.f32 %v562, 0.00761442
  %v579 = vld [vmem:[#allocation3 + $0x1] sm:$0xff]
  %v580 = vld [vmem:[#allocation3 + $0x9] sm:$0xff]
  %v581 = vld [vmem:[#allocation3 + $0x19] sm:$0xff]
  %v582 = vld [vmem:[#allocation3 + $0x21] sm:$0xff]
  %v583 = vld [vmem:[#allocation3 + $0x31] sm:$0xff]
  %v584 = vld [vmem:[#allocation3 + $0x39] sm:$0xff]
  %v585 = vld [vmem:[#allocation3 + $0x49] sm:$0xff]
  %v586 = vld [vmem:[#allocation3 + $0x51] sm:$0xff]
  %v587 = vld [vmem:[#allocation3 + $0x61] sm:$0xff]
  %v588 = vld [vmem:[#allocation3 + $0x69] sm:$0xff]
  %v589 = vld [vmem:[#allocation3 + $0x79] sm:$0xff]
  %v590 = vld [vmem:[#allocation3 + $0x81] sm:$0xff]
  %v591 = vld [vmem:[#allocation3 + $0x91] sm:$0xff]
  %v592 = vld [vmem:[#allocation3 + $0x99] sm:$0xff]
  %v593 = vld [vmem:[#allocation3 + $0xa9] sm:$0xff]
  %v594 = vld [vmem:[#allocation3 + $0xb1] sm:$0xff]
  %v595 = vmul.f32 %v579, 0.036074974
  %v596 = vmul.f32 %v580, 0.036074974
  %v597 = vmul.f32 %v581, 0.036074974
  %v598 = vmul.f32 %v582, 0.036074974
  %v599 = vmul.f32 %v583, 0.036074974
  %v600 = vmul.f32 %v584, 0.036074974
  %v601 = vmul.f32 %v585, 0.036074974
  %v602 = vmul.f32 %v586, 0.036074974
  %v603 = vmul.f32 %v587, 0.036074974
  %v604 = vmul.f32 %v588, 0.036074974
  %v605 = vmul.f32 %v589, 0.036074974
  %v606 = vmul.f32 %v590, 0.036074974
  %v607 = vmul.f32 %v591, 0.036074974
  %v608 = vmul.f32 %v592, 0.036074974
  %v609 = vmul.f32 %v593, 0.036074974
  %v610 = vmul.f32 %v594, 0.036074974
  %v611 = vadd.f32 %v563, %v595
  %v612 = vadd.f32 %v564, %v596
  %v613 = vadd.f32 %v565, %v597
  %v614 = vadd.f32 %v566, %v598
  %v615 = vadd.f32 %v567, %v599
  %v616 = vadd.f32 %v568, %v600
  %v617 = vadd.f32 %v569, %v601
  %v618 = vadd.f32 %v570, %v602
  %v619 = vadd.f32 %v571, %v603
  %v620 = vadd.f32 %v572, %v604
  %v621 = vadd.f32 %v573, %v605
  %v622 = vadd.f32 %v574, %v606
  %v623 = vadd.f32 %v575, %v607
  %v624 = vadd.f32 %v576, %v608
  %v625 = vadd.f32 %v577, %v609
  %v626 = vadd.f32 %v578, %v610
  %v627 = vld [vmem:[#allocation3 + $0x2] sm:$0xff]
  %v628 = vld [vmem:[#allocation3 + $0xa] sm:$0xff]
  %v629 = vld [vmem:[#allocation3 + $0x1a] sm:$0xff]
  %v630 = vld [vmem:[#allocation3 + $0x22] sm:$0xff]
  %v631 = vld [vmem:[#allocation3 + $0x32] sm:$0xff]
  %v632 = vld [vmem:[#allocation3 + $0x3a] sm:$0xff]
  %v633 = vld [vmem:[#allocation3 + $0x4a] sm:$0xff]
  %v634 = vld [vmem:[#allocation3 + $0x52] sm:$0xff]
  %v635 = vld [vmem:[#allocation3 + $0x62] sm:$0xff]
  %v636 = vld [vmem:[#allocation3 + $0x6a] sm:$0xff]
  %v637 = vld [vmem:[#allocation3 + $0x7a] sm:$0xff]
  %v638 = vld [vmem:[#allocation3 + $0x82] sm:$0xff]
  %v639 = vld [vmem:[#allocation3 + $0x92] sm:$0xff]
  %v640 = vld [vmem:[#allocation3 + $0x9a] sm:$0xff]
  %v641 = vld [vmem:[#allocation3 + $0xaa] sm:$0xff]
  %v642 = vld [vmem:[#allocation3 + $0xb2] sm:$0xff]
  %v643 = vmul.f32 %v627, 0.1095861
  %v644 = vmul.f32 %v628, 0.1095861
  %v645 = vmul.f32 %v629, 0.1095861
  %v646 = vmul.f32 %v630, 0.1095861
  %v647 = vmul.f32 %v631, 0.1095861
  %v648 = vmul.f32 %v632, 0.1095861
  %v649 = vmul.f32 %v633, 0.1095861
  %v650 = vmul.f32 %v634, 0.1095861
  %v651 = vmul.f32 %v635, 0.1095861
  %v652 = vmul.f32 %v636, 0.1095861
  %v653 = vmul.f32 %v637, 0.1095861
  %v654 = vmul.f32 %v638, 0.1095861
  %v655 = vmul.f32 %v639, 0.1095861
  %v656 = vmul.f32 %v640, 0.1095861
  %v657 = vmul.f32 %v641, 0.1095861
  %v658 = vmul.f32 %v642, 0.1095861
  %v659 = vadd.f32 %v611, %v643
  %v660 = vadd.f32 %v612, %v644
  %v661 = vadd.f32 %v613, %v645
  %v662 = vadd.f32 %v614, %v646
  %v663 = vadd.f32 %v615, %v647
  %v664 = vadd.f32 %v616, %v648
  %v665 = vadd.f32 %v617, %v649
  %v666 = vadd.f32 %v618, %v650
  %v667 = vadd.f32 %v619, %v651
  %v668 = vadd.f32 %v620, %v652
  %v669 = vadd.f32 %v621, %v653
  %v670 = vadd.f32 %v622, %v654
  %v671 = vadd.f32 %v623, %v655
  %v672 = vadd.f32 %v624, %v656
  %v673 = vadd.f32 %v625, %v657
  %v674 = vadd.f32 %v626, %v658
  %v675 = vld [vmem:[#allocation3 + $0x3] sm:$0xff]
  %v676 = vld [vmem:[#allocation3 + $0xb] sm:$0xff]
  %v677 = vld [vmem:[#allocation3 + $0x1b] sm:$0xff]
  %v678 = vld [vmem:[#allocation3 + $0x23] sm:$0xff]
  %v679 = vld [vmem:[#allocation3 + $0x33] sm:$0xff]
  %v680 = vld [vmem:[#allocation3 + $0x3b] sm:$0xff]
  %v681 = vld [vmem:[#allocation3 + $0x4b] sm:$0xff]
  %v682 = vld [vmem:[#allocation3 + $0x53] sm:$0xff]
  %v683 = vld [vmem:[#allocation3 + $0x63] sm:$0xff]
  %v684 = vld [vmem:[#allocation3 + $0x6b] sm:$0xff]
  %v685 = vld [vmem:[#allocation3 + $0x7b] sm:$0xff]
  %v686 = vld [vmem:[#allocation3 + $0x83] sm:$0xff]
  %v687 = vld [vmem:[#allocation3 + $0x93] sm:$0xff]
  %v688 = vld [vmem:[#allocation3 + $0x9b] sm:$0xff]
  %v689 = vld [vmem:[#allocation3 + $0xab] sm:$0xff]
  %v690 = vld [vmem:[#allocation3 + $0xb3] sm:$0xff]
  %v691 = vmul.f32 %v675, 0.21344456
  %v692 = vmul.f32 %v676, 0.21344456
  %v693 = vmul.f32 %v677, 0.21344456
  %v694 = vmul.f32 %v678, 0.21344456
  %v695 = vmul.f32 %v679, 0.21344456
  %v696 = vmul.f32 %v680, 0.21344456
  %v697 = vmul.f32 %v681, 0.21344456
  %v698 = vmul.f32 %v682, 0.21344456
  %v699 = vmul.f32 %v683, 0.21344456
  %v700 = vmul.f32 %v684, 0.21344456
  %v701 = vmul.f32 %v685, 0.21344456
  %v702 = vmul.f32 %v686, 0.21344456
  %v703 = vmul.f32 %v687, 0.21344456
  %v704 = vmul.f32 %v688, 0.21344456
  %v705 = vmul.f32 %v689, 0.21344456
  %v706 = vmul.f32 %v690, 0.21344456
  %v707 = vadd.f32 %v659, %v691
  %v708 = vadd.f32 %v660, %v692
  %v709 = vadd.f32 %v661, %v693
  %v710 = vadd.f32 %v662, %v694
  %v711 = vadd.f32 %v663, %v695
  %v712 = vadd.f32 %v664, %v696
  %v713 = vadd.f32 %v665, %v697
  %v714 = vadd.f32 %v666, %v698
  %v715 = vadd.f32 %v667, %v699
  %v716 = vadd.f32 %v668, %v700
  %v717 = vadd.f32 %v669, %v701
  %v718 = vadd.f32 %v670, %v702
  %v719 = vadd.f32 %v671, %v703
  %v720 = vadd.f32 %v672, %v704
  %v721 = vadd.f32 %v673, %v705
  %v722 = vadd.f32 %v674, %v706
  %v723 = vld [vmem:[#allocation3 + $0x4] sm:$0xff]
  %v724 = vld [vmem:[#allocation3 + $0xc] sm:$0xff]
  %v725 = vld [vmem:[#allocation3 + $0x1c] sm:$0xff]
  %v726 = vld [vmem:[#allocation3 + $0x24] sm:$0xff]
  %v727 = vld [vmem:[#allocation3 + $0x34] sm:$0xff]
  %v728 = vld [vmem:[#allocation3 + $0x3c] sm:$0xff]
  %v729 = vld [vmem:[#allocation3 + $0x4c] sm:$0xff]
  %v730 = vld [vmem:[#allocation3 + $0x54] sm:$0xff]
  %v731 = vld [vmem:[#allocation3 + $0x64] sm:$0xff]
  %v732 = vld [vmem:[#allocation3 + $0x6c] sm:$0xff]
  %v733 = vld [vmem:[#allocation3 + $0x7c] sm:$0xff]
  %v734 = vld [vmem:[#allocation3 + $0x84] sm:$0xff]
  %v735 = vld [vmem:[#allocation3 + $0x94] sm:$0xff]
  %v736 = vld [vmem:[#allocation3 + $0x9c] sm:$0xff]
  %v737 = vld [vmem:[#allocation3 + $0xac] sm:$0xff]
  %v738 = vld [vmem:[#allocation3 + $0xb4] sm:$0xff]
  %v739 = vmul.f32 %v723, 0.26656
  %v740 = vmul.f32 %v724, 0.26656
  %v741 = vmul.f32 %v725, 0.26656
  %v742 = vmul.f32 %v726, 0.26656
  %v743 = vmul.f32 %v727, 0.26656
  %v744 = vmul.f32 %v728, 0.26656
  %v745 = vmul.f32 %v729, 0.26656
  %v746 = vmul.f32 %v730, 0.26656
  %v747 = vmul.f32 %v731, 0.26656
  %v748 = vmul.f32 %v732, 0.26656
  %v749 = vmul.f32 %v733, 0.26656
  %v750 = vmul.f32 %v734, 0.26656
  %v751 = vmul.f32 %v735, 0.26656
  %v752 = vmul.f32 %v736, 0.26656
  %v753 = vmul.f32 %v737, 0.26656
  %v754 = vmul.f32 %v738, 0.26656
  %v755 = vadd.f32 %v707, %v739
  %v756 = vadd.f32 %v708, %v740
  %v757 = vadd.f32 %v709, %v741
  %v758 = vadd.f32 %v710, %v742
  %v759 = vadd.f32 %v711, %v743
  %v760 = vadd.f32 %v712, %v744
  %v761 = vadd.f32 %v713, %v745
  %v762 = vadd.f32 %v714, %v746
  %v763 = vadd.f32 %v715, %v747
  %v764 = vadd.f32 %v716, %v748
  %v765 = vadd.f32 %v717, %v749
  %v766 = vadd.f32 %v718, %v750
  %v767 = vadd.f32 %v719, %v751
  %v768 = vadd.f32 %v720, %v752
  %v769 = vadd.f32 %v721, %v753
  %v770 = vadd.f32 %v722, %v754
  %v771 = vld [vmem:[#allocation3 + $0x5] sm:$0xff]
  %v772 = vld [vmem:[#allocation3 + $0xd] sm:$0xff]
  %v773 = vld [vmem:[#allocation3 + $0x1d] sm:$0xff]
  %v774 = vld [vmem:[#allocation3 + $0x25] sm:$0xff]
  %v775 = vld [vmem:[#allocation3 + $0x35] sm:$0xff]
  %v776 = vld [vmem:[#allocation3 + $0x3d] sm:$0xff]
  %v777 = vld [vmem:[#allocation3 + $0x4d] sm:$0xff]
  %v778 = vld [vmem:[#allocation3 + $0x55] sm:$0xff]
  %v779 = vld [vmem:[#allocation3 + $0x65] sm:$0xff]
  %v780 = vld [vmem:[#allocation3 + $0x6d] sm:$0xff]
  %v781 = vld [vmem:[#allocation3 + $0x7d] sm:$0xff]
  %v782 = vld [vmem:[#allocation3 + $0x85] sm:$0xff]
  %v783 = vld [vmem:[#allocation3 + $0x95] sm:$0xff]
  %v784 = vld [vmem:[#allocation3 + $0x9d] sm:$0xff]
  %v785 = vld [vmem:[#allocation3 + $0xad] sm:$0xff]
  %v786 = vld [vmem:[#allocation3 + $0xb5] sm:$0xff]
  %v787 = vmul.f32 %v771, 0.21344456
  %v788 = vmul.f32 %v772, 0.21344456
  %v789 = vmul.f32 %v773, 0.21344456
  %v790 = vmul.f32 %v774, 0.21344456
  %v791 = vmul.f32 %v775, 0.21344456
  %v792 = vmul.f32 %v776, 0.21344456
  %v793 = vmul.f32 %v777, 0.21344456
  %v794 = vmul.f32 %v778, 0.21344456
  %v795 = vmul.f32 %v779, 0.21344456
  %v796 = vmul.f32 %v780, 0.21344456
  %v797 = vmul.f32 %v781, 0.21344456
  %v798 = vmul.f32 %v782, 0.21344456
  %v799 = vmul.f32 %v783, 0.21344456
  %v800 = vmul.f32 %v784, 0.21344456
  %v801 = vmul.f32 %v785, 0.21344456
  %v802 = vmul.f32 %v786, 0.21344456
  %v803 = vadd.f32 %v755, %v787
  %v804 = vadd.f32 %v756, %v788
  %v805 = vadd.f32 %v757, %v789
  %v806 = vadd.f32 %v758, %v790
  %v807 = vadd.f32 %v759, %v791
  %v808 = vadd.f32 %v760, %v792
  %v809 = vadd.f32 %v761, %v793
  %v810 = vadd.f32 %v762, %v794
  %v811 = vadd.f32 %v763, %v795
  %v812 = vadd.f32 %v764, %v796
  %v813 = vadd.f32 %v765, %v797
  %v814 = vadd.f32 %v766, %v798
  %v815 = vadd.f32 %v767, %v799
  %v816 = vadd.f32 %v768, %v800
  %v817 = vadd.f32 %v769, %v801
  %v818 = vadd.f32 %v770, %v802
  %v819 = vld [vmem:[#allocation3 + $0x6] sm:$0xff]
  %v820 = vld [vmem:[#allocation3 + $0xe] sm:$0xff]
  %v821 = vld [vmem:[#allocation3 + $0x1e] sm:$0xff]
  %v822 = vld [vmem:[#allocation3 + $0x26] sm:$0xff]
  %v823 = vld [vmem:[#allocation3 + $0x36] sm:$0xff]
  %v824 = vld [vmem:[#allocation3 + $0x3e] sm:$0xff]
  %v825 = vld [vmem:[#allocation3 + $0x4e] sm:$0xff]
  %v826 = vld [vmem:[#allocation3 + $0x56] sm:$0xff]
  %v827 = vld [vmem:[#allocation3 + $0x66] sm:$0xff]
  %v828 = vld [vmem:[#allocation3 + $0x6e] sm:$0xff]
  %v829 = vld [vmem:[#allocation3 + $0x7e] sm:$0xff]
  %v830 = vld [vmem:[#allocation3 + $0x86] sm:$0xff]
  %v831 = vld [vmem:[#allocation3 + $0x96] sm:$0xff]
  %v832 = vld [vmem:[#allocation3 + $0x9e] sm:$0xff]
  %v833 = vld [vmem:[#allocation3 + $0xae] sm:$0xff]
  %v834 = vld [vmem:[#allocation3 + $0xb6] sm:$0xff]
  %v835 = vmul.f32 %v819, 0.1095861
  %v836 = vmul.f32 %v820, 0.1095861
  %v837 = vmul.f32 %v821, 0.1095861
  %v838 = vmul.f32 %v822, 0.1095861
  %v839 = vmul.f32 %v823, 0.1095861
  %v840 = vmul.f32 %v824, 0.1095861
  %v841 = vmul.f32 %v825, 0.1095861
  %v842 = vmul.f32 %v826, 0.1095861
  %v843 = vmul.f32 %v827, 0.1095861
  %v844 = vmul.f32 %v828, 0.1095861
  %v845 = vmul.f32 %v829, 0.1095861
  %v846 = vmul.f32 %v830, 0.1095861
  %v847 = vmul.f32 %v831, 0.1095861
  %v848 = vmul.f32 %v832, 0.1095861
  %v849 = vmul.f32 %v833, 0.1095861
  %v850 = vmul.f32 %v834, 0.1095861
  %v851 = vadd.f32 %v803, %v835
  %v852 = vadd.f32 %v804, %v836
  %v853 = vadd.f32 %v805, %v837
  %v854 = vadd.f32 %v806, %v838
  %v855 = vadd.f32 %v807, %v839
  %v856 = vadd.f32 %v808, %v840
  %v857 = vadd.f32 %v809, %v841
  %v858 = vadd.f32 %v810, %v842
  %v859 = vadd.f32 %v811, %v843
  %v860 = vadd.f32 %v812, %v844
  %v861 = vadd.f32 %v813, %v845
  %v862 = vadd.f32 %v814, %v846
  %v863 = vadd.f32 %v815, %v847
  %v864 = vadd.f32 %v816, %v848
  %v865 = vadd.f32 %v817, %v849
  %v866 = vadd.f32 %v818, %v850
  %v867 = vld [vmem:[#allocation3 + $0x7] sm:$0xff]
  %v868 = vld [vmem:[#allocation3 + $0xf] sm:$0xff]
  %v869 = vld [vmem:[#allocation3 + $0x1f] sm:$0xff]
  %v870 = vld [vmem:[#allocation3 + $0x27] sm:$0xff]
  %v871 = vld [vmem:[#allocation3 + $0x37] sm:$0xff]
  %v872 = vld [vmem:[#allocation3 + $0x3f] sm:$0xff]
  %v873 = vld [vmem:[#allocation3 + $0x4f] sm:$0xff]
  %v874 = vld [vmem:[#allocation3 + $0x57] sm:$0xff]
  %v875 = vld [vmem:[#allocation3 + $0x67] sm:$0xff]
  %v876 = vld [vmem:[#allocation3 + $0x6f] sm:$0xff]
  %v877 = vld [vmem:[#allocation3 + $0x7f] sm:$0xff]
  %v878 = vld [vmem:[#allocation3 + $0x87] sm:$0xff]
  %v879 = vld [vmem:[#allocation3 + $0x97] sm:$0xff]
  %v880 = vld [vmem:[#allocation3 + $0x9f] sm:$0xff]
  %v881 = vld [vmem:[#allocation3 + $0xaf] sm:$0xff]
  %v882 = vld [vmem:[#allocation3 + $0xb7] sm:$0xff]
  %v883 = vmul.f32 %v867, 0.036074974
  %v884 = vmul.f32 %v868, 0.036074974
  %v885 = vmul.f32 %v869, 0.036074974
  %v886 = vmul.f32 %v870, 0.036074974
  %v887 = vmul.f32 %v871, 0.036074974
  %v888 = vmul.f32 %v872, 0.036074974
  %v889 = vmul.f32 %v873, 0.036074974
  %v890 = vmul.f32 %v874, 0.036074974
  %v891 = vmul.f32 %v875, 0.036074974
  %v892 = vmul.f32 %v876, 0.036074974
  %v893 = vmul.f32 %v877, 0.036074974
  %v894 = vmul.f32 %v878, 0.036074974
  %v895 = vmul.f32 %v879, 0.036074974
  %v896 = vmul.f32 %v880, 0.036074974
  %v897 = vmul.f32 %v881, 0.036074974
  %v898 = vmul.f32 %v882, 0.036074974
  %v899 = vadd.f32 %v851, %v883
  %v900 = vadd.f32 %v852, %v884
  %v901 = vadd.f32 %v853, %v885
  %v902 = vadd.f32 %v854, %v886
  %v903 = vadd.f32 %v855, %v887
  %v904 = vadd.f32 %v856, %v888
  %v905 = vadd.f32 %v857, %v889
  %v906 = vadd.f32 %v858, %v890
  %v907 = vadd.f32 %v859, %v891
  %v908 = vadd.f32 %v860, %v892
  %v909 = vadd.f32 %v861, %v893
  %v910 = vadd.f32 %v862, %v894
  %v911 = vadd.f32 %v863, %v895
  %v912 = vadd.f32 %v864, %v896
  %v913 = vadd.f32 %v865, %v897
  %v914 = vadd.f32 %v866, %v898
  %v915 = vld [vmem:[#allocation3 + $0x10] sm:$0xff]
  %v916 = vld [vmem:[#allocation3 + $0x28] sm:$0xff]
  %v917 = vld [vmem:[#allocation3 + $0x40] sm:$0xff]
  %v918 = vld [vmem:[#allocation3 + $0x58] sm:$0xff]
  %v919 = vld [vmem:[#allocation3 + $0x70] sm:$0xff]
  %v920 = vld [vmem:[#allocation3 + $0x88] sm:$0xff]
  %v921 = vld [vmem:[#allocation3 + $0xa0] sm:$0xff]
  %v922 = vld [vmem:[#allocation3 + $0xb8] sm:$0xff]
  %v923 = vmul.f32 %v915, 0.00761442
  %v924 = vmul.f32 %v916, 0.00761442
  %v925 = vmul.f32 %v917, 0.00761442
  %v926 = vmul.f32 %v918, 0.00761442
  %v927 = vmul.f32 %v919, 0.00761442
  %v928 = vmul.f32 %v920, 0.00761442
  %v929 = vmul.f32 %v921, 0.00761442
  %v930 = vmul.f32 %v922, 0.00761442
  %v931 = vadd.f32 %v899, %v564
  %v932 = vadd.f32 %v900, %v923
  %v933 = vadd.f32 %v901, %v566
  %v934 = vadd.f32 %v902, %v924
  %v935 = vadd.f32 %v903, %v568
  %v936 = vadd.f32 %v904, %v925
  %v937 = vadd.f32 %v905, %v570
  %v938 = vadd.f32 %v906, %v926
  %v939 = vadd.f32 %v907, %v572
  %v940 = vadd.f32 %v908, %v927
  %v941 = vadd.f32 %v909, %v574
  %v942 = vadd.f32 %v910, %v928
  %v943 = vadd.f32 %v911, %v576
  %v944 = vadd.f32 %v912, %v929
  %v945 = vadd.f32 %v913, %v578
  %v946 = vadd.f32 %v914, %v930
  %947 = vst.msk [vmem:[%s1] sm:$0xff] %vm8, %v931
  %948 = vst.msk [vmem:[%s1 + $0x8] sm:$0xff] %vm8, %v932
  %949 = vst.msk [vmem:[%s1 + $0x10] sm:$0xff] %vm8, %v933
  %950 = vst.msk [vmem:[%s1 + $0x18] sm:$0xff] %vm8, %v934
  %951 = vst.msk [vmem:[%s1 + $0x20] sm:$0xff] %vm8, %v935
  %952 = vst.msk [vmem:[%s1 + $0x28] sm:$0xff] %vm8, %v936
  %953 = vst.msk [vmem:[%s1 + $0x30] sm:$0xff] %vm8, %v937
  %954 = vst.msk [vmem:[%s1 + $0x38] sm:$0xff] %vm8, %v938
  %955 = vst.msk [vmem:[%s1 + $0x40] sm:$0xff] %vm8, %v939
  %956 = vst.msk [vmem:[%s1 + $0x48] sm:$0xff] %vm8, %v940
  %957 = vst.msk [vmem:[%s1 + $0x50] sm:$0xff] %vm8, %v941
  %958 = vst.msk [vmem:[%s1 + $0x58] sm:$0xff] %vm8, %v942
  %959 = vst.msk [vmem:[%s1 + $0x60] sm:$0xff] %vm8, %v943
  %960 = vst.msk [vmem:[%s1 + $0x68] sm:$0xff] %vm8, %v944
  %961 = vst.msk [vmem:[%s1 + $0x70] sm:$0xff] %vm8, %v945
  %962 = vst.msk [vmem:[%s1 + $0x78] sm:$0xff] %vm8, %v946
  %v963 = vld [vmem:[%s482] sm:$0xff]
  %v964 = vld [vmem:[%s482 + $0x8] sm:$0xff]
  %v965 = vld [vmem:[%s482 + $0x10] sm:$0xff]
  %v966 = vld [vmem:[%s482 + $0x18] sm:$0xff]
  %v967 = vld [vmem:[%s482 + $0x20] sm:$0xff]
  %v968 = vld [vmem:[%s482 + $0x28] sm:$0xff]
  %v969 = vld [vmem:[%s482 + $0x30] sm:$0xff]
  %v970 = vld [vmem:[%s482 + $0x38] sm:$0xff]
  %v971 = vld [vmem:[%s482 + $0x40] sm:$0xff]
  %v972 = vld [vmem:[%s482 + $0x48] sm:$0xff]
  %v973 = vld [vmem:[%s482 + $0x50] sm:$0xff]
  %v974 = vld [vmem:[%s482 + $0x58] sm:$0xff]
  %v975 = vld [vmem:[%s482 + $0x60] sm:$0xff]
  %v976 = vld [vmem:[%s482 + $0x68] sm:$0xff]
  %v977 = vld [vmem:[%s482 + $0x70] sm:$0xff]
  %v978 = vld [vmem:[%s482 + $0x78] sm:$0xff]
  %v979 = vmul.f32 %v963, 0.00761442
  %v980 = vmul.f32 %v964, 0.00761442
  %v981 = vmul.f32 %v965, 0.00761442
  %v982 = vmul.f32 %v966, 0.00761442
  %v983 = vmul.f32 %v967, 0.00761442
  %v984 = vmul.f32 %v968, 0.00761442
  %v985 = vmul.f32 %v969, 0.00761442
  %v986 = vmul.f32 %v970, 0.00761442
  %v987 = vmul.f32 %v971, 0.00761442
  %v988 = vmul.f32 %v972, 0.00761442
  %v989 = vmul.f32 %v973, 0.00761442
  %v990 = vmul.f32 %v974, 0.00761442
  %v991 = vmul.f32 %v975, 0.00761442
  %v992 = vmul.f32 %v976, 0.00761442
  %v993 = vmul.f32 %v977, 0.00761442
  %v994 = vmul.f32 %v978, 0.00761442
  %s995 = scalar_lea.vmem [#allocation2], 144
  %v996 = vld [vmem:[%s995] sm:$0xff]
  %v997 = vld [vmem:[%s995 + $0x8] sm:$0xff]
  %v998 = vld [vmem:[%s995 + $0x10] sm:$0xff]
  %v999 = vld [vmem:[%s995 + $0x18] sm:$0xff]
  %v1000 = vld [vmem:[%s995 + $0x20] sm:$0xff]
  %v1001 = vld [vmem:[%s995 + $0x28] sm:$0xff]
  %v1002 = vld [vmem:[%s995 + $0x30] sm:$0xff]
  %v1003 = vld [vmem:[%s995 + $0x38] sm:$0xff]
  %v1004 = vld [vmem:[%s995 + $0x40] sm:$0xff]
  %v1005 = vld [vmem:[%s995 + $0x48] sm:$0xff]
  %v1006 = vld [vmem:[%s995 + $0x50] sm:$0xff]
  %v1007 = vld [vmem:[%s995 + $0x58] sm:$0xff]
  %v1008 = vld [vmem:[%s995 + $0x60] sm:$0xff]
  %v1009 = vld [vmem:[%s995 + $0x68] sm:$0xff]
  %v1010 = vld [vmem:[%s995 + $0x70] sm:$0xff]
  %v1011 = vld [vmem:[%s995 + $0x78] sm:$0xff]
  %v1012 = vmul.f32 %v996, 0.036074974
  %v1013 = vmul.f32 %v997, 0.036074974
  %v1014 = vmul.f32 %v998, 0.036074974
  %v1015 = vmul.f32 %v999, 0.036074974
  %v1016 = vmul.f32 %v1000, 0.036074974
  %v1017 = vmul.f32 %v1001, 0.036074974
  %v1018 = vmul.f32 %v1002, 0.036074974
  %v1019 = vmul.f32 %v1003, 0.036074974
  %v1020 = vmul.f32 %v1004, 0.036074974
  %v1021 = vmul.f32 %v1005, 0.036074974
  %v1022 = vmul.f32 %v1006, 0.036074974
  %v1023 = vmul.f32 %v1007, 0.036074974
  %v1024 = vmul.f32 %v1008, 0.036074974
  %v1025 = vmul.f32 %v1009, 0.036074974
  %v1026 = vmul.f32 %v1010, 0.036074974
  %v1027 = vmul.f32 %v1011, 0.036074974
  %v1028 = vadd.f32 %v979, %v1012
  %v1029 = vadd.f32 %v980, %v1013
  %v1030 = vadd.f32 %v981, %v1014
  %v1031 = vadd.f32 %v982, %v1015
  %v1032 = vadd.f32 %v983, %v1016
  %v1033 = vadd.f32 %v984, %v1017
  %v1034 = vadd.f32 %v985, %v1018
  %v1035 = vadd.f32 %v986, %v1019
  %v1036 = vadd.f32 %v987, %v1020
  %v1037 = vadd.f32 %v988, %v1021
  %v1038 = vadd.f32 %v989, %v1022
  %v1039 = vadd.f32 %v990, %v1023
  %v1040 = vadd.f32 %v991, %v1024
  %v1041 = vadd.f32 %v992, %v1025
  %v1042 = vadd.f32 %v993, %v1026
  %v1043 = vadd.f32 %v994, %v1027
  %s1044 = scalar_lea.vmem [#allocation2], 160
  %v1045 = vld [vmem:[%s1044] sm:$0xff]
  %v1046 = vld [vmem:[%s1044 + $0x8] sm:$0xff]
  %v1047 = vld [vmem:[%s1044 + $0x10] sm:$0xff]
  %v1048 = vld [vmem:[%s1044 + $0x18] sm:$0xff]
  %v1049 = vld [vmem:[%s1044 + $0x20] sm:$0xff]
  %v1050 = vld [vmem:[%s1044 + $0x28] sm:$0xff]
  %v1051 = vld [vmem:[%s1044 + $0x30] sm:$0xff]
  %v1052 = vld [vmem:[%s1044 + $0x38] sm:$0xff]
  %v1053 = vld [vmem:[%s1044 + $0x40] sm:$0xff]
  %v1054 = vld [vmem:[%s1044 + $0x48] sm:$0xff]
  %v1055 = vld [vmem:[%s1044 + $0x50] sm:$0xff]
  %v1056 = vld [vmem:[%s1044 + $0x58] sm:$0xff]
  %v1057 = vld [vmem:[%s1044 + $0x60] sm:$0xff]
  %v1058 = vld [vmem:[%s1044 + $0x68] sm:$0xff]
  %v1059 = vld [vmem:[%s1044 + $0x70] sm:$0xff]
  %v1060 = vld [vmem:[%s1044 + $0x78] sm:$0xff]
  %v1061 = vmul.f32 %v1045, 0.1095861
  %v1062 = vmul.f32 %v1046, 0.1095861
  %v1063 = vmul.f32 %v1047, 0.1095861
  %v1064 = vmul.f32 %v1048, 0.1095861
  %v1065 = vmul.f32 %v1049, 0.1095861
  %v1066 = vmul.f32 %v1050, 0.1095861
  %v1067 = vmul.f32 %v1051, 0.1095861
  %v1068 = vmul.f32 %v1052, 0.1095861
  %v1069 = vmul.f32 %v1053, 0.1095861
  %v1070 = vmul.f32 %v1054, 0.1095861
  %v1071 = vmul.f32 %v1055, 0.1095861
  %v1072 = vmul.f32 %v1056, 0.1095861
  %v1073 = vmul.f32 %v1057, 0.1095861
  %v1074 = vmul.f32 %v1058, 0.1095861
  %v1075 = vmul.f32 %v1059, 0.1095861
  %v1076 = vmul.f32 %v1060, 0.1095861
  %v1077 = vadd.f32 %v1028, %v1061
  %v1078 = vadd.f32 %v1029, %v1062
  %v1079 = vadd.f32 %v1030, %v1063
  %v1080 = vadd.f32 %v1031, %v1064
  %v1081 = vadd.f32 %v1032, %v1065
  %v1082 = vadd.f32 %v1033, %v1066
  %v1083 = vadd.f32 %v1034, %v1067
  %v1084 = vadd.f32 %v1035, %v1068
  %v1085 = vadd.f32 %v1036, %v1069
  %v1086 = vadd.f32 %v1037, %v1070
  %v1087 = vadd.f32 %v1038, %v1071
  %v1088 = vadd.f32 %v1039, %v1072
  %v1089 = vadd.f32 %v1040, %v1073
  %v1090 = vadd.f32 %v1041, %v1074
  %v1091 = vadd.f32 %v1042, %v1075
  %v1092 = vadd.f32 %v1043, %v1076
  %s1093 = scalar_lea.vmem [#allocation2], 176
  %v1094 = vld [vmem:[%s1093] sm:$0xff]
  %v1095 = vld [vmem:[%s1093 + $0x8] sm:$0xff]
  %v1096 = vld [vmem:[%s1093 + $0x10] sm:$0xff]
  %v1097 = vld [vmem:[%s1093 + $0x18] sm:$0xff]
  %v1098 = vld [vmem:[%s1093 + $0x20] sm:$0xff]
  %v1099 = vld [vmem:[%s1093 + $0x28] sm:$0xff]
  %v1100 = vld [vmem:[%s1093 + $0x30] sm:$0xff]
  %v1101 = vld [vmem:[%s1093 + $0x38] sm:$0xff]
  %v1102 = vld [vmem:[%s1093 + $0x40] sm:$0xff]
  %v1103 = vld [vmem:[%s1093 + $0x48] sm:$0xff]
  %v1104 = vld [vmem:[%s1093 + $0x50] sm:$0xff]
  %v1105 = vld [vmem:[%s1093 + $0x58] sm:$0xff]
  %v1106 = vld [vmem:[%s1093 + $0x60] sm:$0xff]
  %v1107 = vld [vmem:[%s1093 + $0x68] sm:$0xff]
  %v1108 = vld [vmem:[%s1093 + $0x70] sm:$0xff]
  %v1109 = vld [vmem:[%s1093 + $0x78] sm:$0xff]
  %v1110 = vmul.f32 %v1094, 0.21344456
  %v1111 = vmul.f32 %v1095, 0.21344456
  %v1112 = vmul.f32 %v1096, 0.21344456
  %v1113 = vmul.f32 %v1097, 0.21344456
  %v1114 = vmul.f32 %v1098, 0.21344456
  %v1115 = vmul.f32 %v1099, 0.21344456
  %v1116 = vmul.f32 %v1100, 0.21344456
  %v1117 = vmul.f32 %v1101, 0.21344456
  %v1118 = vmul.f32 %v1102, 0.21344456
  %v1119 = vmul.f32 %v1103, 0.21344456
  %v1120 = vmul.f32 %v1104, 0.21344456
  %v1121 = vmul.f32 %v1105, 0.21344456
  %v1122 = vmul.f32 %v1106, 0.21344456
  %v1123 = vmul.f32 %v1107, 0.21344456
  %v1124 = vmul.f32 %v1108, 0.21344456
  %v1125 = vmul.f32 %v1109, 0.21344456
  %v1126 = vadd.f32 %v1077, %v1110
  %v1127 = vadd.f32 %v1078, %v1111
  %v1128 = vadd.f32 %v1079, %v1112
  %v1129 = vadd.f32 %v1080, %v1113
  %v1130 = vadd.f32 %v1081, %v1114
  %v1131 = vadd.f32 %v1082, %v1115
  %v1132 = vadd.f32 %v1083, %v1116
  %v1133 = vadd.f32 %v1084, %v1117
  %v1134 = vadd.f32 %v1085, %v1118
  %v1135 = vadd.f32 %v1086, %v1119
  %v1136 = vadd.f32 %v1087, %v1120
  %v1137 = vadd.f32 %v1088, %v1121
  %v1138 = vadd.f32 %v1089, %v1122
  %v1139 = vadd.f32 %v1090, %v1123
  %v1140 = vadd.f32 %v1091, %v1124
  %v1141 = vadd.f32 %v1092, %v1125
  %s1142 = scalar_lea.vmem [#allocation2], 192
  %v1143 = vld [vmem:[%s1142] sm:$0xff]
  %v1144 = vld [vmem:[%s1142 + $0x8] sm:$0xff]
  %v1145 = vld [vmem:[%s1142 + $0x10] sm:$0xff]
  %v1146 = vld [vmem:[%s1142 + $0x18] sm:$0xff]
  %v1147 = vld [vmem:[%s1142 + $0x20] sm:$0xff]
  %v1148 = vld [vmem:[%s1142 + $0x28] sm:$0xff]
  %v1149 = vld [vmem:[%s1142 + $0x30] sm:$0xff]
  %v1150 = vld [vmem:[%s1142 + $0x38] sm:$0xff]
  %v1151 = vld [vmem:[%s1142 + $0x40] sm:$0xff]
  %v1152 = vld [vmem:[%s1142 + $0x48] sm:$0xff]
  %v1153 = vld [vmem:[%s1142 + $0x50] sm:$0xff]
  %v1154 = vld [vmem:[%s1142 + $0x58] sm:$0xff]
  %v1155 = vld [vmem:[%s1142 + $0x60] sm:$0xff]
  %v1156 = vld [vmem:[%s1142 + $0x68] sm:$0xff]
  %v1157 = vld [vmem:[%s1142 + $0x70] sm:$0xff]
  %v1158 = vld [vmem:[%s1142 + $0x78] sm:$0xff]
  %v1159 = vmul.f32 %v1143, 0.26656
  %v1160 = vmul.f32 %v1144, 0.26656
  %v1161 = vmul.f32 %v1145, 0.26656
  %v1162 = vmul.f32 %v1146, 0.26656
  %v1163 = vmul.f32 %v1147, 0.26656
  %v1164 = vmul.f32 %v1148, 0.26656
  %v1165 = vmul.f32 %v1149, 0.26656
  %v1166 = vmul.f32 %v1150, 0.26656
  %v1167 = vmul.f32 %v1151, 0.26656
  %v1168 = vmul.f32 %v1152, 0.26656
  %v1169 = vmul.f32 %v1153, 0.26656
  %v1170 = vmul.f32 %v1154, 0.26656
  %v1171 = vmul.f32 %v1155, 0.26656
  %v1172 = vmul.f32 %v1156, 0.26656
  %v1173 = vmul.f32 %v1157, 0.26656
  %v1174 = vmul.f32 %v1158, 0.26656
  %v1175 = vadd.f32 %v1126, %v1159
  %v1176 = vadd.f32 %v1127, %v1160
  %v1177 = vadd.f32 %v1128, %v1161
  %v1178 = vadd.f32 %v1129, %v1162
  %v1179 = vadd.f32 %v1130, %v1163
  %v1180 = vadd.f32 %v1131, %v1164
  %v1181 = vadd.f32 %v1132, %v1165
  %v1182 = vadd.f32 %v1133, %v1166
  %v1183 = vadd.f32 %v1134, %v1167
  %v1184 = vadd.f32 %v1135, %v1168
  %v1185 = vadd.f32 %v1136, %v1169
  %v1186 = vadd.f32 %v1137, %v1170
  %v1187 = vadd.f32 %v1138, %v1171
  %v1188 = vadd.f32 %v1139, %v1172
  %v1189 = vadd.f32 %v1140, %v1173
  %v1190 = vadd.f32 %v1141, %v1174
  %s1191 = scalar_lea.vmem [#allocation2], 208
  %v1192 = vld [vmem:[%s1191] sm:$0xff]
  %v1193 = vld [vmem:[%s1191 + $0x8] sm:$0xff]
  %v1194 = vld [vmem:[%s1191 + $0x10] sm:$0xff]
  %v1195 = vld [vmem:[%s1191 + $0x18] sm:$0xff]
  %v1196 = vld [vmem:[%s1191 + $0x20] sm:$0xff]
  %v1197 = vld [vmem:[%s1191 + $0x28] sm:$0xff]
  %v1198 = vld [vmem:[%s1191 + $0x30] sm:$0xff]
  %v1199 = vld [vmem:[%s1191 + $0x38] sm:$0xff]
  %v1200 = vld [vmem:[%s1191 + $0x40] sm:$0xff]
  %v1201 = vld [vmem:[%s1191 + $0x48] sm:$0xff]
  %v1202 = vld [vmem:[%s1191 + $0x50] sm:$0xff]
  %v1203 = vld [vmem:[%s1191 + $0x58] sm:$0xff]
  %v1204 = vld [vmem:[%s1191 + $0x60] sm:$0xff]
  %v1205 = vld [vmem:[%s1191 + $0x68] sm:$0xff]
  %v1206 = vld [vmem:[%s1191 + $0x70] sm:$0xff]
  %v1207 = vld [vmem:[%s1191 + $0x78] sm:$0xff]
  %v1208 = vmul.f32 %v1192, 0.21344456
  %v1209 = vmul.f32 %v1193, 0.21344456
  %v1210 = vmul.f32 %v1194, 0.21344456
  %v1211 = vmul.f32 %v1195, 0.21344456
  %v1212 = vmul.f32 %v1196, 0.21344456
  %v1213 = vmul.f32 %v1197, 0.21344456
  %v1214 = vmul.f32 %v1198, 0.21344456
  %v1215 = vmul.f32 %v1199, 0.21344456
  %v1216 = vmul.f32 %v1200, 0.21344456
  %v1217 = vmul.f32 %v1201, 0.21344456
  %v1218 = vmul.f32 %v1202, 0.21344456
  %v1219 = vmul.f32 %v1203, 0.21344456
  %v1220 = vmul.f32 %v1204, 0.21344456
  %v1221 = vmul.f32 %v1205, 0.21344456
  %v1222 = vmul.f32 %v1206, 0.21344456
  %v1223 = vmul.f32 %v1207, 0.21344456
  %v1224 = vadd.f32 %v1175, %v1208
  %v1225 = vadd.f32 %v1176, %v1209
  %v1226 = vadd.f32 %v1177, %v1210
  %v1227 = vadd.f32 %v1178, %v1211
  %v1228 = vadd.f32 %v1179, %v1212
  %v1229 = vadd.f32 %v1180, %v1213
  %v1230 = vadd.f32 %v1181, %v1214
  %v1231 = vadd.f32 %v1182, %v1215
  %v1232 = vadd.f32 %v1183, %v1216
  %v1233 = vadd.f32 %v1184, %v1217
  %v1234 = vadd.f32 %v1185, %v1218
  %v1235 = vadd.f32 %v1186, %v1219
  %v1236 = vadd.f32 %v1187, %v1220
  %v1237 = vadd.f32 %v1188, %v1221
  %v1238 = vadd.f32 %v1189, %v1222
  %v1239 = vadd.f32 %v1190, %v1223
  %s1240 = scalar_lea.vmem [#allocation2], 224
  %v1241 = vld [vmem:[%s1240] sm:$0xff]
  %v1242 = vld [vmem:[%s1240 + $0x8] sm:$0xff]
  %v1243 = vld [vmem:[%s1240 + $0x10] sm:$0xff]
  %v1244 = vld [vmem:[%s1240 + $0x18] sm:$0xff]
  %v1245 = vld [vmem:[%s1240 + $0x20] sm:$0xff]
  %v1246 = vld [vmem:[%s1240 + $0x28] sm:$0xff]
  %v1247 = vld [vmem:[%s1240 + $0x30] sm:$0xff]
  %v1248 = vld [vmem:[%s1240 + $0x38] sm:$0xff]
  %v1249 = vld [vmem:[%s1240 + $0x40] sm:$0xff]
  %v1250 = vld [vmem:[%s1240 + $0x48] sm:$0xff]
  %v1251 = vld [vmem:[%s1240 + $0x50] sm:$0xff]
  %v1252 = vld [vmem:[%s1240 + $0x58] sm:$0xff]
  %v1253 = vld [vmem:[%s1240 + $0x60] sm:$0xff]
  %v1254 = vld [vmem:[%s1240 + $0x68] sm:$0xff]
  %v1255 = vld [vmem:[%s1240 + $0x70] sm:$0xff]
  %v1256 = vld [vmem:[%s1240 + $0x78] sm:$0xff]
  %v1257 = vmul.f32 %v1241, 0.1095861
  %v1258 = vmul.f32 %v1242, 0.1095861
  %v1259 = vmul.f32 %v1243, 0.1095861
  %v1260 = vmul.f32 %v1244, 0.1095861
  %v1261 = vmul.f32 %v1245, 0.1095861
  %v1262 = vmul.f32 %v1246, 0.1095861
  %v1263 = vmul.f32 %v1247, 0.1095861
  %v1264 = vmul.f32 %v1248, 0.1095861
  %v1265 = vmul.f32 %v1249, 0.1095861
  %v1266 = vmul.f32 %v1250, 0.1095861
  %v1267 = vmul.f32 %v1251, 0.1095861
  %v1268 = vmul.f32 %v1252, 0.1095861
  %v1269 = vmul.f32 %v1253, 0.1095861
  %v1270 = vmul.f32 %v1254, 0.1095861
  %v1271 = vmul.f32 %v1255, 0.1095861
  %v1272 = vmul.f32 %v1256, 0.1095861
  %v1273 = vadd.f32 %v1224, %v1257
  %v1274 = vadd.f32 %v1225, %v1258
  %v1275 = vadd.f32 %v1226, %v1259
  %v1276 = vadd.f32 %v1227, %v1260
  %v1277 = vadd.f32 %v1228, %v1261
  %v1278 = vadd.f32 %v1229, %v1262
  %v1279 = vadd.f32 %v1230, %v1263
  %v1280 = vadd.f32 %v1231, %v1264
  %v1281 = vadd.f32 %v1232, %v1265
  %v1282 = vadd.f32 %v1233, %v1266
  %v1283 = vadd.f32 %v1234, %v1267
  %v1284 = vadd.f32 %v1235, %v1268
  %v1285 = vadd.f32 %v1236, %v1269
  %v1286 = vadd.f32 %v1237, %v1270
  %v1287 = vadd.f32 %v1238, %v1271
  %v1288 = vadd.f32 %v1239, %v1272
  %s1289 = scalar_lea.vmem [#allocation2], 240
  %v1290 = vld [vmem:[%s1289] sm:$0xff]
  %v1291 = vld [vmem:[%s1289 + $0x8] sm:$0xff]
  %v1292 = vld [vmem:[%s1289 + $0x10] sm:$0xff]
  %v1293 = vld [vmem:[%s1289 + $0x18] sm:$0xff]
  %v1294 = vld [vmem:[%s1289 + $0x20] sm:$0xff]
  %v1295 = vld [vmem:[%s1289 + $0x28] sm:$0xff]
  %v1296 = vld [vmem:[%s1289 + $0x30] sm:$0xff]
  %v1297 = vld [vmem:[%s1289 + $0x38] sm:$0xff]
  %v1298 = vld [vmem:[%s1289 + $0x40] sm:$0xff]
  %v1299 = vld [vmem:[%s1289 + $0x48] sm:$0xff]
  %v1300 = vld [vmem:[%s1289 + $0x50] sm:$0xff]
  %v1301 = vld [vmem:[%s1289 + $0x58] sm:$0xff]
  %v1302 = vld [vmem:[%s1289 + $0x60] sm:$0xff]
  %v1303 = vld [vmem:[%s1289 + $0x68] sm:$0xff]
  %v1304 = vld [vmem:[%s1289 + $0x70] sm:$0xff]
  %v1305 = vld [vmem:[%s1289 + $0x78] sm:$0xff]
  %v1306 = vmul.f32 %v1290, 0.036074974
  %v1307 = vmul.f32 %v1291, 0.036074974
  %v1308 = vmul.f32 %v1292, 0.036074974
  %v1309 = vmul.f32 %v1293, 0.036074974
  %v1310 = vmul.f32 %v1294, 0.036074974
  %v1311 = vmul.f32 %v1295, 0.036074974
  %v1312 = vmul.f32 %v1296, 0.036074974
  %v1313 = vmul.f32 %v1297, 0.036074974
  %v1314 = vmul.f32 %v1298, 0.036074974
  %v1315 = vmul.f32 %v1299, 0.036074974
  %v1316 = vmul.f32 %v1300, 0.036074974
  %v1317 = vmul.f32 %v1301, 0.036074974
  %v1318 = vmul.f32 %v1302, 0.036074974
  %v1319 = vmul.f32 %v1303, 0.036074974
  %v1320 = vmul.f32 %v1304, 0.036074974
  %v1321 = vmul.f32 %v1305, 0.036074974
  %v1322 = vadd.f32 %v1273, %v1306
  %v1323 = vadd.f32 %v1274, %v1307
  %v1324 = vadd.f32 %v1275, %v1308
  %v1325 = vadd.f32 %v1276, %v1309
  %v1326 = vadd.f32 %v1277, %v1310
  %v1327 = vadd.f32 %v1278, %v1311
  %v1328 = vadd.f32 %v1279, %v1312
  %v1329 = vadd.f32 %v1280, %v1313
  %v1330 = vadd.f32 %v1281, %v1314
  %v1331 = vadd.f32 %v1282, %v1315
  %v1332 = vadd.f32 %v1283, %v1316
  %v1333 = vadd.f32 %v1284, %v1317
  %v1334 = vadd.f32 %v1285, %v1318
  %v1335 = vadd.f32 %v1286, %v1319
  %v1336 = vadd.f32 %v1287, %v1320
  %v1337 = vadd.f32 %v1288, %v1321
  %s1338 = scalar_lea.vmem [#allocation2], 256
  %v1339 = vld [vmem:[%s1338] sm:$0xff]
  %v1340 = vld [vmem:[%s1338 + $0x8] sm:$0xff]
  %v1341 = vld [vmem:[%s1338 + $0x10] sm:$0xff]
  %v1342 = vld [vmem:[%s1338 + $0x18] sm:$0xff]
  %v1343 = vld [vmem:[%s1338 + $0x20] sm:$0xff]
  %v1344 = vld [vmem:[%s1338 + $0x28] sm:$0xff]
  %v1345 = vld [vmem:[%s1338 + $0x30] sm:$0xff]
  %v1346 = vld [vmem:[%s1338 + $0x38] sm:$0xff]
  %v1347 = vld [vmem:[%s1338 + $0x40] sm:$0xff]
  %v1348 = vld [vmem:[%s1338 + $0x48] sm:$0xff]
  %v1349 = vld [vmem:[%s1338 + $0x50] sm:$0xff]
  %v1350 = vld [vmem:[%s1338 + $0x58] sm:$0xff]
  %v1351 = vld [vmem:[%s1338 + $0x60] sm:$0xff]
  %v1352 = vld [vmem:[%s1338 + $0x68] sm:$0xff]
  %v1353 = vld [vmem:[%s1338 + $0x70] sm:$0xff]
  %v1354 = vld [vmem:[%s1338 + $0x78] sm:$0xff]
  %v1355 = vmul.f32 %v1339, 0.00761442
  %v1356 = vmul.f32 %v1340, 0.00761442
  %v1357 = vmul.f32 %v1341, 0.00761442
  %v1358 = vmul.f32 %v1342, 0.00761442
  %v1359 = vmul.f32 %v1343, 0.00761442
  %v1360 = vmul.f32 %v1344, 0.00761442
  %v1361 = vmul.f32 %v1345, 0.00761442
  %v1362 = vmul.f32 %v1346, 0.00761442
  %v1363 = vmul.f32 %v1347, 0.00761442
  %v1364 = vmul.f32 %v1348, 0.00761442
  %v1365 = vmul.f32 %v1349, 0.00761442
  %v1366 = vmul.f32 %v1350, 0.00761442
  %v1367 = vmul.f32 %v1351, 0.00761442
  %v1368 = vmul.f32 %v1352, 0.00761442
  %v1369 = vmul.f32 %v1353, 0.00761442
  %v1370 = vmul.f32 %v1354, 0.00761442
  %v1371 = vadd.f32 %v1322, %v1355
  %v1372 = vadd.f32 %v1323, %v1356
  %v1373 = vadd.f32 %v1324, %v1357
  %v1374 = vadd.f32 %v1325, %v1358
  %v1375 = vadd.f32 %v1326, %v1359
  %v1376 = vadd.f32 %v1327, %v1360
  %v1377 = vadd.f32 %v1328, %v1361
  %v1378 = vadd.f32 %v1329, %v1362
  %v1379 = vadd.f32 %v1330, %v1363
  %v1380 = vadd.f32 %v1331, %v1364
  %v1381 = vadd.f32 %v1332, %v1365
  %v1382 = vadd.f32 %v1333, %v1366
  %v1383 = vadd.f32 %v1334, %v1367
  %v1384 = vadd.f32 %v1335, %v1368
  %v1385 = vadd.f32 %v1336, %v1369
  %v1386 = vadd.f32 %v1337, %v1370
  %1387 = vst.msk [vmem:[#allocation3 + $0x4] sm:$0xff] %vm8, %v1371
  %1388 = vst.msk [vmem:[#allocation3 + $0xc] sm:$0xff] %vm8, %v1372
  %1389 = vst.msk [vmem:[#allocation3 + $0x1c] sm:$0xff] %vm8, %v1373
  %1390 = vst.msk [vmem:[#allocation3 + $0x24] sm:$0xff] %vm8, %v1374
  %1391 = vst.msk [vmem:[#allocation3 + $0x34] sm:$0xff] %vm8, %v1375
  %1392 = vst.msk [vmem:[#allocation3 + $0x3c] sm:$0xff] %vm8, %v1376
  %1393 = vst.msk [vmem:[#allocation3 + $0x4c] sm:$0xff] %vm8, %v1377
  %1394 = vst.msk [vmem:[#allocation3 + $0x54] sm:$0xff] %vm8, %v1378
  %1395 = vst.msk [vmem:[#allocation3 + $0x64] sm:$0xff] %vm8, %v1379
  %1396 = vst.msk [vmem:[#allocation3 + $0x6c] sm:$0xff] %vm8, %v1380
  %1397 = vst.msk [vmem:[#allocation3 + $0x7c] sm:$0xff] %vm8, %v1381
  %1398 = vst.msk [vmem:[#allocation3 + $0x84] sm:$0xff] %vm8, %v1382
  %1399 = vst.msk [vmem:[#allocation3 + $0x94] sm:$0xff] %vm8, %v1383
  %1400 = vst.msk [vmem:[#allocation3 + $0x9c] sm:$0xff] %vm8, %v1384
  %1401 = vst.msk [vmem:[#allocation3 + $0xac] sm:$0xff] %vm8, %v1385
  %1402 = vst.msk [vmem:[#allocation3 + $0xb4] sm:$0xff] %vm8, %v1386
  %v1403 = vld [vmem:[#allocation3] sm:$0xff]
  %v1404 = vld [vmem:[#allocation3 + $0x8] sm:$0xff]
  %v1405 = vld [vmem:[#allocation3 + $0x18] sm:$0xff]
  %v1406 = vld [vmem:[#allocation3 + $0x20] sm:$0xff]
  %v1407 = vld [vmem:[#allocation3 + $0x30] sm:$0xff]
  %v1408 = vld [vmem:[#allocation3 + $0x38] sm:$0xff]
  %v1409 = vld [vmem:[#allocation3 + $0x48] sm:$0xff]
  %v1410 = vld [vmem:[#allocation3 + $0x50] sm:$0xff]
  %v1411 = vld [vmem:[#allocation3 + $0x60] sm:$0xff]
  %v1412 = vld [vmem:[#allocation3 + $0x68] sm:$0xff]
  %v1413 = vld [vmem:[#allocation3 + $0x78] sm:$0xff]
  %v1414 = vld [vmem:[#allocation3 + $0x80] sm:$0xff]
  %v1415 = vld [vmem:[#allocation3 + $0x90] sm:$0xff]
  %v1416 = vld [vmem:[#allocation3 + $0x98] sm:$0xff]
  %v1417 = vld [vmem:[#allocation3 + $0xa8] sm:$0xff]
  %v1418 = vld [vmem:[#allocation3 + $0xb0] sm:$0xff]
  %v1419 = vmul.f32 %v1403, 0.00761442
  %v1420 = vmul.f32 %v1404, 0.00761442
  %v1421 = vmul.f32 %v1405, 0.00761442
  %v1422 = vmul.f32 %v1406, 0.00761442
  %v1423 = vmul.f32 %v1407, 0.00761442
  %v1424 = vmul.f32 %v1408, 0.00761442
  %v1425 = vmul.f32 %v1409, 0.00761442
  %v1426 = vmul.f32 %v1410, 0.00761442
  %v1427 = vmul.f32 %v1411, 0.00761442
  %v1428 = vmul.f32 %v1412, 0.00761442
  %v1429 = vmul.f32 %v1413, 0.00761442
  %v1430 = vmul.f32 %v1414, 0.00761442
  %v1431 = vmul.f32 %v1415, 0.00761442
  %v1432 = vmul.f32 %v1416, 0.00761442
  %v1433 = vmul.f32 %v1417, 0.00761442
  %v1434 = vmul.f32 %v1418, 0.00761442
  %v1435 = vld [vmem:[#allocation3 + $0x1] sm:$0xff]
  %v1436 = vld [vmem:[#allocation3 + $0x9] sm:$0xff]
  %v1437 = vld [vmem:[#allocation3 + $0x19] sm:$0xff]
  %v1438 = vld [vmem:[#allocation3 + $0x21] sm:$0xff]
  %v1439 = vld [vmem:[#allocation3 + $0x31] sm:$0xff]
  %v1440 = vld [vmem:[#allocation3 + $0x39] sm:$0xff]
  %v1441 = vld [vmem:[#allocation3 + $0x49] sm:$0xff]
  %v1442 = vld [vmem:[#allocation3 + $0x51] sm:$0xff]
  %v1443 = vld [vmem:[#allocation3 + $0x61] sm:$0xff]
  %v1444 = vld [vmem:[#allocation3 + $0x69] sm:$0xff]
  %v1445 = vld [vmem:[#allocation3 + $0x79] sm:$0xff]
  %v1446 = vld [vmem:[#allocation3 + $0x81] sm:$0xff]
  %v1447 = vld [vmem:[#allocation3 + $0x91] sm:$0xff]
  %v1448 = vld [vmem:[#allocation3 + $0x99] sm:$0xff]
  %v1449 = vld [vmem:[#allocation3 + $0xa9] sm:$0xff]
  %v1450 = vld [vmem:[#allocation3 + $0xb1] sm:$0xff]
  %v1451 = vmul.f32 %v1435, 0.036074974
  %v1452 = vmul.f32 %v1436, 0.036074974
  %v1453 = vmul.f32 %v1437, 0.036074974
  %v1454 = vmul.f32 %v1438, 0.036074974
  %v1455 = vmul.f32 %v1439, 0.036074974
  %v1456 = vmul.f32 %v1440, 0.036074974
  %v1457 = vmul.f32 %v1441, 0.036074974
  %v1458 = vmul.f32 %v1442, 0.036074974
  %v1459 = vmul.f32 %v1443, 0.036074974
  %v1460 = vmul.f32 %v1444, 0.036074974
  %v1461 = vmul.f32 %v1445, 0.036074974
  %v1462 = vmul.f32 %v1446, 0.036074974
  %v1463 = vmul.f32 %v1447, 0.036074974
  %v1464 = vmul.f32 %v1448, 0.036074974
  %v1465 = vmul.f32 %v1449, 0.036074974
  %v1466 = vmul.f32 %v1450, 0.036074974
  %v1467 = vadd.f32 %v1419, %v1451
  %v1468 = vadd.f32 %v1420, %v1452
  %v1469 = vadd.f32 %v1421, %v1453
  %v1470 = vadd.f32 %v1422, %v1454
  %v1471 = vadd.f32 %v1423, %v1455
  %v1472 = vadd.f32 %v1424, %v1456
  %v1473 = vadd.f32 %v1425, %v1457
  %v1474 = vadd.f32 %v1426, %v1458
  %v1475 = vadd.f32 %v1427, %v1459
  %v1476 = vadd.f32 %v1428, %v1460
  %v1477 = vadd.f32 %v1429, %v1461
  %v1478 = vadd.f32 %v1430, %v1462
  %v1479 = vadd.f32 %v1431, %v1463
  %v1480 = vadd.f32 %v1432, %v1464
  %v1481 = vadd.f32 %v1433, %v1465
  %v1482 = vadd.f32 %v1434, %v1466
  %v1483 = vld [vmem:[#allocation3 + $0x2] sm:$0xff]
  %v1484 = vld [vmem:[#allocation3 + $0xa] sm:$0xff]
  %v1485 = vld [vmem:[#allocation3 + $0x1a] sm:$0xff]
  %v1486 = vld [vmem:[#allocation3 + $0x22] sm:$0xff]
  %v1487 = vld [vmem:[#allocation3 + $0x32] sm:$0xff]
  %v1488 = vld [vmem:[#allocation3 + $0x3a] sm:$0xff]
  %v1489 = vld [vmem:[#allocation3 + $0x4a] sm:$0xff]
  %v1490 = vld [vmem:[#allocation3 + $0x52] sm:$0xff]
  %v1491 = vld [vmem:[#allocation3 + $0x62] sm:$0xff]
  %v1492 = vld [vmem:[#allocation3 + $0x6a] sm:$0xff]
  %v1493 = vld [vmem:[#allocation3 + $0x7a] sm:$0xff]
  %v1494 = vld [vmem:[#allocation3 + $0x82] sm:$0xff]
  %v1495 = vld [vmem:[#allocation3 + $0x92] sm:$0xff]
  %v1496 = vld [vmem:[#allocation3 + $0x9a] sm:$0xff]
  %v1497 = vld [vmem:[#allocation3 + $0xaa] sm:$0xff]
  %v1498 = vld [vmem:[#allocation3 + $0xb2] sm:$0xff]
  %v1499 = vmul.f32 %v1483, 0.1095861
  %v1500 = vmul.f32 %v1484, 0.1095861
  %v1501 = vmul.f32 %v1485, 0.1095861
  %v1502 = vmul.f32 %v1486, 0.1095861
  %v1503 = vmul.f32 %v1487, 0.1095861
  %v1504 = vmul.f32 %v1488, 0.1095861
  %v1505 = vmul.f32 %v1489, 0.1095861
  %v1506 = vmul.f32 %v1490, 0.1095861
  %v1507 = vmul.f32 %v1491, 0.1095861
  %v1508 = vmul.f32 %v1492, 0.1095861
  %v1509 = vmul.f32 %v1493, 0.1095861
  %v1510 = vmul.f32 %v1494, 0.1095861
  %v1511 = vmul.f32 %v1495, 0.1095861
  %v1512 = vmul.f32 %v1496, 0.1095861
  %v1513 = vmul.f32 %v1497, 0.1095861
  %v1514 = vmul.f32 %v1498, 0.1095861
  %v1515 = vadd.f32 %v1467, %v1499
  %v1516 = vadd.f32 %v1468, %v1500
  %v1517 = vadd.f32 %v1469, %v1501
  %v1518 = vadd.f32 %v1470, %v1502
  %v1519 = vadd.f32 %v1471, %v1503
  %v1520 = vadd.f32 %v1472, %v1504
  %v1521 = vadd.f32 %v1473, %v1505
  %v1522 = vadd.f32 %v1474, %v1506
  %v1523 = vadd.f32 %v1475, %v1507
  %v1524 = vadd.f32 %v1476, %v1508
  %v1525 = vadd.f32 %v1477, %v1509
  %v1526 = vadd.f32 %v1478, %v1510
  %v1527 = vadd.f32 %v1479, %v1511
  %v1528 = vadd.f32 %v1480, %v1512
  %v1529 = vadd.f32 %v1481, %v1513
  %v1530 = vadd.f32 %v1482, %v1514
  %v1531 = vld [vmem:[#allocation3 + $0x3] sm:$0xff]
  %v1532 = vld [vmem:[#allocation3 + $0xb] sm:$0xff]
  %v1533 = vld [vmem:[#allocation3 + $0x1b] sm:$0xff]
  %v1534 = vld [vmem:[#allocation3 + $0x23] sm:$0xff]
  %v1535 = vld [vmem:[#allocation3 + $0x33] sm:$0xff]
  %v1536 = vld [vmem:[#allocation3 + $0x3b] sm:$0xff]
  %v1537 = vld [vmem:[#allocation3 + $0x4b] sm:$0xff]
  %v1538 = vld [vmem:[#allocation3 + $0x53] sm:$0xff]
  %v1539 = vld [vmem:[#allocation3 + $0x63] sm:$0xff]
  %v1540 = vld [vmem:[#allocation3 + $0x6b] sm:$0xff]
  %v1541 = vld [vmem:[#allocation3 + $0x7b] sm:$0xff]
  %v1542 = vld [vmem:[#allocation3 + $0x83] sm:$0xff]
  %v1543 = vld [vmem:[#allocation3 + $0x93] sm:$0xff]
  %v1544 = vld [vmem:[#allocation3 + $0x9b] sm:$0xff]
  %v1545 = vld [vmem:[#allocation3 + $0xab] sm:$0xff]
  %v1546 = vld [vmem:[#allocation3 + $0xb3] sm:$0xff]
  %v1547 = vmul.f32 %v1531, 0.21344456
  %v1548 = vmul.f32 %v1532, 0.21344456
  %v1549 = vmul.f32 %v1533, 0.21344456
  %v1550 = vmul.f32 %v1534, 0.21344456
  %v1551 = vmul.f32 %v1535, 0.21344456
  %v1552 = vmul.f32 %v1536, 0.21344456
  %v1553 = vmul.f32 %v1537, 0.21344456
  %v1554 = vmul.f32 %v1538, 0.21344456
  %v1555 = vmul.f32 %v1539, 0.21344456
  %v1556 = vmul.f32 %v1540, 0.21344456
  %v1557 = vmul.f32 %v1541, 0.21344456
  %v1558 = vmul.f32 %v1542, 0.21344456
  %v1559 = vmul.f32 %v1543, 0.21344456
  %v1560 = vmul.f32 %v1544, 0.21344456
  %v1561 = vmul.f32 %v1545, 0.21344456
  %v1562 = vmul.f32 %v1546, 0.21344456
  %v1563 = vadd.f32 %v1515, %v1547
  %v1564 = vadd.f32 %v1516, %v1548
  %v1565 = vadd.f32 %v1517, %v1549
  %v1566 = vadd.f32 %v1518, %v1550
  %v1567 = vadd.f32 %v1519, %v1551
  %v1568 = vadd.f32 %v1520, %v1552
  %v1569 = vadd.f32 %v1521, %v1553
  %v1570 = vadd.f32 %v1522, %v1554
  %v1571 = vadd.f32 %v1523, %v1555
  %v1572 = vadd.f32 %v1524, %v1556
  %v1573 = vadd.f32 %v1525, %v1557
  %v1574 = vadd.f32 %v1526, %v1558
  %v1575 = vadd.f32 %v1527, %v1559
  %v1576 = vadd.f32 %v1528, %v1560
  %v1577 = vadd.f32 %v1529, %v1561
  %v1578 = vadd.f32 %v1530, %v1562
  %v1579 = vld [vmem:[#allocation3 + $0x4] sm:$0xff]
  %v1580 = vld [vmem:[#allocation3 + $0xc] sm:$0xff]
  %v1581 = vld [vmem:[#allocation3 + $0x1c] sm:$0xff]
  %v1582 = vld [vmem:[#allocation3 + $0x24] sm:$0xff]
  %v1583 = vld [vmem:[#allocation3 + $0x34] sm:$0xff]
  %v1584 = vld [vmem:[#allocation3 + $0x3c] sm:$0xff]
  %v1585 = vld [vmem:[#allocation3 + $0x4c] sm:$0xff]
  %v1586 = vld [vmem:[#allocation3 + $0x54] sm:$0xff]
  %v1587 = vld [vmem:[#allocation3 + $0x64] sm:$0xff]
  %v1588 = vld [vmem:[#allocation3 + $0x6c] sm:$0xff]
  %v1589 = vld [vmem:[#allocation3 + $0x7c] sm:$0xff]
  %v1590 = vld [vmem:[#allocation3 + $0x84] sm:$0xff]
  %v1591 = vld [vmem:[#allocation3 + $0x94] sm:$0xff]
  %v1592 = vld [vmem:[#allocation3 + $0x9c] sm:$0xff]
  %v1593 = vld [vmem:[#allocation3 + $0xac] sm:$0xff]
  %v1594 = vld [vmem:[#allocation3 + $0xb4] sm:$0xff]
  %v1595 = vmul.f32 %v1579, 0.26656
  %v1596 = vmul.f32 %v1580, 0.26656
  %v1597 = vmul.f32 %v1581, 0.26656
  %v1598 = vmul.f32 %v1582, 0.26656
  %v1599 = vmul.f32 %v1583, 0.26656
  %v1600 = vmul.f32 %v1584, 0.26656
  %v1601 = vmul.f32 %v1585, 0.26656
  %v1602 = vmul.f32 %v1586, 0.26656
  %v1603 = vmul.f32 %v1587, 0.26656
  %v1604 = vmul.f32 %v1588, 0.26656
  %v1605 = vmul.f32 %v1589, 0.26656
  %v1606 = vmul.f32 %v1590, 0.26656
  %v1607 = vmul.f32 %v1591, 0.26656
  %v1608 = vmul.f32 %v1592, 0.26656
  %v1609 = vmul.f32 %v1593, 0.26656
  %v1610 = vmul.f32 %v1594, 0.26656
  %v1611 = vadd.f32 %v1563, %v1595
  %v1612 = vadd.f32 %v1564, %v1596
  %v1613 = vadd.f32 %v1565, %v1597
  %v1614 = vadd.f32 %v1566, %v1598
  %v1615 = vadd.f32 %v1567, %v1599
  %v1616 = vadd.f32 %v1568, %v1600
  %v1617 = vadd.f32 %v1569, %v1601
  %v1618 = vadd.f32 %v1570, %v1602
  %v1619 = vadd.f32 %v1571, %v1603
  %v1620 = vadd.f32 %v1572, %v1604
  %v1621 = vadd.f32 %v1573, %v1605
  %v1622 = vadd.f32 %v1574, %v1606
  %v1623 = vadd.f32 %v1575, %v1607
  %v1624 = vadd.f32 %v1576, %v1608
  %v1625 = vadd.f32 %v1577, %v1609
  %v1626 = vadd.f32 %v1578, %v1610
  %v1627 = vld [vmem:[#allocation3 + $0x5] sm:$0xff]
  %v1628 = vld [vmem:[#allocation3 + $0xd] sm:$0xff]
  %v1629 = vld [vmem:[#allocation3 + $0x1d] sm:$0xff]
  %v1630 = vld [vmem:[#allocation3 + $0x25] sm:$0xff]
  %v1631 = vld [vmem:[#allocation3 + $0x35] sm:$0xff]
  %v1632 = vld [vmem:[#allocation3 + $0x3d] sm:$0xff]
  %v1633 = vld [vmem:[#allocation3 + $0x4d] sm:$0xff]
  %v1634 = vld [vmem:[#allocation3 + $0x55] sm:$0xff]
  %v1635 = vld [vmem:[#allocation3 + $0x65] sm:$0xff]
  %v1636 = vld [vmem:[#allocation3 + $0x6d] sm:$0xff]
  %v1637 = vld [vmem:[#allocation3 + $0x7d] sm:$0xff]
  %v1638 = vld [vmem:[#allocation3 + $0x85] sm:$0xff]
  %v1639 = vld [vmem:[#allocation3 + $0x95] sm:$0xff]
  %v1640 = vld [vmem:[#allocation3 + $0x9d] sm:$0xff]
  %v1641 = vld [vmem:[#allocation3 + $0xad] sm:$0xff]
  %v1642 = vld [vmem:[#allocation3 + $0xb5] sm:$0xff]
  %v1643 = vmul.f32 %v1627, 0.21344456
  %v1644 = vmul.f32 %v1628, 0.21344456
  %v1645 = vmul.f32 %v1629, 0.21344456
  %v1646 = vmul.f32 %v1630, 0.21344456
  %v1647 = vmul.f32 %v1631, 0.21344456
  %v1648 = vmul.f32 %v1632, 0.21344456
  %v1649 = vmul.f32 %v1633, 0.21344456
  %v1650 = vmul.f32 %v1634, 0.21344456
  %v1651 = vmul.f32 %v1635, 0.21344456
  %v1652 = vmul.f32 %v1636, 0.21344456
  %v1653 = vmul.f32 %v1637, 0.21344456
  %v1654 = vmul.f32 %v1638, 0.21344456
  %v1655 = vmul.f32 %v1639, 0.21344456
  %v1656 = vmul.f32 %v1640, 0.21344456
  %v1657 = vmul.f32 %v1641, 0.21344456
  %v1658 = vmul.f32 %v1642, 0.21344456
  %v1659 = vadd.f32 %v1611, %v1643
  %v1660 = vadd.f32 %v1612, %v1644
  %v1661 = vadd.f32 %v1613, %v1645
  %v1662 = vadd.f32 %v1614, %v1646
  %v1663 = vadd.f32 %v1615, %v1647
  %v1664 = vadd.f32 %v1616, %v1648
  %v1665 = vadd.f32 %v1617, %v1649
  %v1666 = vadd.f32 %v1618, %v1650
  %v1667 = vadd.f32 %v1619, %v1651
  %v1668 = vadd.f32 %v1620, %v1652
  %v1669 = vadd.f32 %v1621, %v1653
  %v1670 = vadd.f32 %v1622, %v1654
  %v1671 = vadd.f32 %v1623, %v1655
  %v1672 = vadd.f32 %v1624, %v1656
  %v1673 = vadd.f32 %v1625, %v1657
  %v1674 = vadd.f32 %v1626, %v1658
  %v1675 = vld [vmem:[#allocation3 + $0x6] sm:$0xff]
  %v1676 = vld [vmem:[#allocation3 + $0xe] sm:$0xff]
  %v1677 = vld [vmem:[#allocation3 + $0x1e] sm:$0xff]
  %v1678 = vld [vmem:[#allocation3 + $0x26] sm:$0xff]
  %v1679 = vld [vmem:[#allocation3 + $0x36] sm:$0xff]
  %v1680 = vld [vmem:[#allocation3 + $0x3e] sm:$0xff]
  %v1681 = vld [vmem:[#allocation3 + $0x4e] sm:$0xff]
  %v1682 = vld [vmem:[#allocation3 + $0x56] sm:$0xff]
  %v1683 = vld [vmem:[#allocation3 + $0x66] sm:$0xff]
  %v1684 = vld [vmem:[#allocation3 + $0x6e] sm:$0xff]
  %v1685 = vld [vmem:[#allocation3 + $0x7e] sm:$0xff]
  %v1686 = vld [vmem:[#allocation3 + $0x86] sm:$0xff]
  %v1687 = vld [vmem:[#allocation3 + $0x96] sm:$0xff]
  %v1688 = vld [vmem:[#allocation3 + $0x9e] sm:$0xff]
  %v1689 = vld [vmem:[#allocation3 + $0xae] sm:$0xff]
  %v1690 = vld [vmem:[#allocation3 + $0xb6] sm:$0xff]
  %v1691 = vmul.f32 %v1675, 0.1095861
  %v1692 = vmul.f32 %v1676, 0.1095861
  %v1693 = vmul.f32 %v1677, 0.1095861
  %v1694 = vmul.f32 %v1678, 0.1095861
  %v1695 = vmul.f32 %v1679, 0.1095861
  %v1696 = vmul.f32 %v1680, 0.1095861
  %v1697 = vmul.f32 %v1681, 0.1095861
  %v1698 = vmul.f32 %v1682, 0.1095861
  %v1699 = vmul.f32 %v1683, 0.1095861
  %v1700 = vmul.f32 %v1684, 0.1095861
  %v1701 = vmul.f32 %v1685, 0.1095861
  %v1702 = vmul.f32 %v1686, 0.1095861
  %v1703 = vmul.f32 %v1687, 0.1095861
  %v1704 = vmul.f32 %v1688, 0.1095861
  %v1705 = vmul.f32 %v1689, 0.1095861
  %v1706 = vmul.f32 %v1690, 0.1095861
  %v1707 = vadd.f32 %v1659, %v1691
  %v1708 = vadd.f32 %v1660, %v1692
  %v1709 = vadd.f32 %v1661, %v1693
  %v1710 = vadd.f32 %v1662, %v1694
  %v1711 = vadd.f32 %v1663, %v1695
  %v1712 = vadd.f32 %v1664, %v1696
  %v1713 = vadd.f32 %v1665, %v1697
  %v1714 = vadd.f32 %v1666, %v1698
  %v1715 = vadd.f32 %v1667, %v1699
  %v1716 = vadd.f32 %v1668, %v1700
  %v1717 = vadd.f32 %v1669, %v1701
  %v1718 = vadd.f32 %v1670, %v1702
  %v1719 = vadd.f32 %v1671, %v1703
  %v1720 = vadd.f32 %v1672, %v1704
  %v1721 = vadd.f32 %v1673, %v1705
  %v1722 = vadd.f32 %v1674, %v1706
  %v1723 = vld [vmem:[#allocation3 + $0x7] sm:$0xff]
  %v1724 = vld [vmem:[#allocation3 + $0xf] sm:$0xff]
  %v1725 = vld [vmem:[#allocation3 + $0x1f] sm:$0xff]
  %v1726 = vld [vmem:[#allocation3 + $0x27] sm:$0xff]
  %v1727 = vld [vmem:[#allocation3 + $0x37] sm:$0xff]
  %v1728 = vld [vmem:[#allocation3 + $0x3f] sm:$0xff]
  %v1729 = vld [vmem:[#allocation3 + $0x4f] sm:$0xff]
  %v1730 = vld [vmem:[#allocation3 + $0x57] sm:$0xff]
  %v1731 = vld [vmem:[#allocation3 + $0x67] sm:$0xff]
  %v1732 = vld [vmem:[#allocation3 + $0x6f] sm:$0xff]
  %v1733 = vld [vmem:[#allocation3 + $0x7f] sm:$0xff]
  %v1734 = vld [vmem:[#allocation3 + $0x87] sm:$0xff]
  %v1735 = vld [vmem:[#allocation3 + $0x97] sm:$0xff]
  %v1736 = vld [vmem:[#allocation3 + $0x9f] sm:$0xff]
  %v1737 = vld [vmem:[#allocation3 + $0xaf] sm:$0xff]
  %v1738 = vld [vmem:[#allocation3 + $0xb7] sm:$0xff]
  %v1739 = vmul.f32 %v1723, 0.036074974
  %v1740 = vmul.f32 %v1724, 0.036074974
  %v1741 = vmul.f32 %v1725, 0.036074974
  %v1742 = vmul.f32 %v1726, 0.036074974
  %v1743 = vmul.f32 %v1727, 0.036074974
  %v1744 = vmul.f32 %v1728, 0.036074974
  %v1745 = vmul.f32 %v1729, 0.036074974
  %v1746 = vmul.f32 %v1730, 0.036074974
  %v1747 = vmul.f32 %v1731, 0.036074974
  %v1748 = vmul.f32 %v1732, 0.036074974
  %v1749 = vmul.f32 %v1733, 0.036074974
  %v1750 = vmul.f32 %v1734, 0.036074974
  %v1751 = vmul.f32 %v1735, 0.036074974
  %v1752 = vmul.f32 %v1736, 0.036074974
  %v1753 = vmul.f32 %v1737, 0.036074974
  %v1754 = vmul.f32 %v1738, 0.036074974
  %v1755 = vadd.f32 %v1707, %v1739
  %v1756 = vadd.f32 %v1708, %v1740
  %v1757 = vadd.f32 %v1709, %v1741
  %v1758 = vadd.f32 %v1710, %v1742
  %v1759 = vadd.f32 %v1711, %v1743
  %v1760 = vadd.f32 %v1712, %v1744
  %v1761 = vadd.f32 %v1713, %v1745
  %v1762 = vadd.f32 %v1714, %v1746
  %v1763 = vadd.f32 %v1715, %v1747
  %v1764 = vadd.f32 %v1716, %v1748
  %v1765 = vadd.f32 %v1717, %v1749
  %v1766 = vadd.f32 %v1718, %v1750
  %v1767 = vadd.f32 %v1719, %v1751
  %v1768 = vadd.f32 %v1720, %v1752
  %v1769 = vadd.f32 %v1721, %v1753
  %v1770 = vadd.f32 %v1722, %v1754
  %v1771 = vld [vmem:[#allocation3 + $0x10] sm:$0xff]
  %v1772 = vld [vmem:[#allocation3 + $0x28] sm:$0xff]
  %v1773 = vld [vmem:[#allocation3 + $0x40] sm:$0xff]
  %v1774 = vld [vmem:[#allocation3 + $0x58] sm:$0xff]
  %v1775 = vld [vmem:[#allocation3 + $0x70] sm:$0xff]
  %v1776 = vld [vmem:[#allocation3 + $0x88] sm:$0xff]
  %v1777 = vld [vmem:[#allocation3 + $0xa0] sm:$0xff]
  %v1778 = vld [vmem:[#allocation3 + $0xb8] sm:$0xff]
  %v1779 = vmul.f32 %v1771, 0.00761442
  %v1780 = vmul.f32 %v1772, 0.00761442
  %v1781 = vmul.f32 %v1773, 0.00761442
  %v1782 = vmul.f32 %v1774, 0.00761442
  %v1783 = vmul.f32 %v1775, 0.00761442
  %v1784 = vmul.f32 %v1776, 0.00761442
  %v1785 = vmul.f32 %v1777, 0.00761442
  %v1786 = vmul.f32 %v1778, 0.00761442
  %v1787 = vadd.f32 %v1755, %v1420
  %v1788 = vadd.f32 %v1756, %v1779
  %v1789 = vadd.f32 %v1757, %v1422
  %v1790 = vadd.f32 %v1758, %v1780
  %v1791 = vadd.f32 %v1759, %v1424
  %v1792 = vadd.f32 %v1760, %v1781
  %v1793 = vadd.f32 %v1761, %v1426
  %v1794 = vadd.f32 %v1762, %v1782
  %v1795 = vadd.f32 %v1763, %v1428
  %v1796 = vadd.f32 %v1764, %v1783
  %v1797 = vadd.f32 %v1765, %v1430
  %v1798 = vadd.f32 %v1766, %v1784
  %v1799 = vadd.f32 %v1767, %v1432
  %v1800 = vadd.f32 %v1768, %v1785
  %v1801 = vadd.f32 %v1769, %v1434
  %v1802 = vadd.f32 %v1770, %v1786
  %s1803 = scalar_lea.vmem %s1, 128
  %1804 = vst.msk [vmem:[%s1803] sm:$0xff] %vm8, %v1787
  %1805 = vst.msk [vmem:[%s1803 + $0x8] sm:$0xff] %vm8, %v1788
  %1806 = vst.msk [vmem:[%s1803 + $0x10] sm:$0xff] %vm8, %v1789
  %1807 = vst.msk [vmem:[%s1803 + $0x18] sm:$0xff] %vm8, %v1790
  %1808 = vst.msk [vmem:[%s1803 + $0x20] sm:$0xff] %vm8, %v1791
  %1809 = vst.msk [vmem:[%s1803 + $0x28] sm:$0xff] %vm8, %v1792
  %1810 = vst.msk [vmem:[%s1803 + $0x30] sm:$0xff] %vm8, %v1793
  %1811 = vst.msk [vmem:[%s1803 + $0x38] sm:$0xff] %vm8, %v1794
  %1812 = vst.msk [vmem:[%s1803 + $0x40] sm:$0xff] %vm8, %v1795
  %1813 = vst.msk [vmem:[%s1803 + $0x48] sm:$0xff] %vm8, %v1796
  %1814 = vst.msk [vmem:[%s1803 + $0x50] sm:$0xff] %vm8, %v1797
  %1815 = vst.msk [vmem:[%s1803 + $0x58] sm:$0xff] %vm8, %v1798
  %1816 = vst.msk [vmem:[%s1803 + $0x60] sm:$0xff] %vm8, %v1799
  %1817 = vst.msk [vmem:[%s1803 + $0x68] sm:$0xff] %vm8, %v1800
  %1818 = vst.msk [vmem:[%s1803 + $0x70] sm:$0xff] %vm8, %v1801
  %1819 = vst.msk [vmem:[%s1803 + $0x78] sm:$0xff] %vm8, %v1802
  // Predicated region
  $region6: #{tpu_custom_call.1} parent=0 // pred_check
    _
  $region7: #{tpu_custom_call.1} parent=0 // pred_check_branch
    %1821 = sbr.rel (0) target = $region9
  $region8: #{tpu_custom_call.1} parent=0 // pred_region
    _
  $region9: #{tpu_custom_call.1} parent=0 // pred_fallthru
    _
  // Predicated region
  $region10: #{tpu_custom_call.1} parent=0 // pred_check
    _
  $region11: #{tpu_custom_call.1} parent=0 // pred_check_branch
    %1823 = sbr.rel (0) target = $region13
  $region12: #{tpu_custom_call.1} parent=0 // pred_region
    _
  $region13: #{tpu_custom_call.1} parent=0 // pred_fallthru
    _

</llo_original>
